<compile_context>
chip_gen: v7x
topology: tpu7x:2x2x1
jax: 0.10.0
libtpu: 0.0.40
codegen_flags: <defaults>
</compile_context>

<pallas_src>
import numpy as np
import jax
import jax.numpy as jnp
from jax.experimental import pallas as pl
from jax.experimental.pallas import tpu as pltpu

F = 128  # lane-dense feature width used for every operand / output


def _pursuit_gnn_kernel(a_ref, x_ref, w1_ref, b1_ref, w2_ref, b2_ref,
                        w3_ref, b3_ref, pool_ref, wh_ref, bh_ref, out_ref):
    """One grid step = one chunk of observations (block-diagonal adjacency)."""
    a = a_ref[...]                                           # (Nc, Nc) bf16

    def gcn_layer(h_bf16, w_ref, b_ref):
        # X @ W on the MXU (bf16 operands, f32 accumulation) ...
        h = jnp.dot(h_bf16, w_ref[...], preferred_element_type=jnp.float32)
        # ... then A_hat @ (XW); bias add + ReLU stay in f32.
        h = jnp.dot(a, h.astype(jnp.bfloat16),
                    preferred_element_type=jnp.float32) + b_ref[...]
        return jnp.maximum(h, 0.0)

    h = gcn_layer(x_ref[...], w1_ref, b1_ref)                # (Nc, 128) f32
    h = gcn_layer(h.astype(jnp.bfloat16), w2_ref, b2_ref)
    h = gcn_layer(h.astype(jnp.bfloat16), w3_ref, b3_ref)

    # global_mean_pool for every graph in the chunk: (Gc, Nc) @ (Nc, 128)
    g = jnp.dot(pool_ref[...], h.astype(jnp.bfloat16),
                preferred_element_type=jnp.float32)

    # fused policy+value heads -> single lane-dense (Gc, 128) store
    out_ref[...] = jnp.dot(g.astype(jnp.bfloat16), wh_ref[...],
                           preferred_element_type=jnp.float32) + bh_ref[...]


def pursuit_gnn_forward(a_chunk, x_nodes, pool_chunk, params, *, num_outputs):
    """Batched fused GCN forward. Returns (policy_out, value_out)."""
    w1, b1, w2, b2, w3, b3, wh, bh = params
    Nc = a_chunk.shape[0]
    Gc = pool_chunk.shape[0]
    num_steps = x_nodes.shape[0] // Nc

    flops = num_steps * (3 * 2 * Nc * F * F        # feature matmuls
                         + 3 * 2 * Nc * Nc * F     # adjacency matmuls
                         + 2 * Gc * Nc * F         # pooling
                         + 2 * Gc * F * F)         # fused heads
    bytes_accessed = (int(a_chunk.nbytes) + int(x_nodes.nbytes)
                      + int(pool_chunk.nbytes)
                      + sum(int(p.nbytes) for p in params)
                      + num_steps * Gc * F * 4)

    heads = pl.pallas_call(
        _pursuit_gnn_kernel,
        out_shape=jax.ShapeDtypeStruct((num_steps * Gc, F), jnp.float32),
        grid=(num_steps,),
        in_specs=[
            pl.BlockSpec((Nc, Nc), lambda s: (0, 0)),    # A_hat chunk (shared)
            pl.BlockSpec((Nc, F), lambda s: (s, 0)),     # node features, per step
            pl.BlockSpec((F, F), lambda s: (0, 0)),      # W1 (padded 128x128)
            pl.BlockSpec((1, F), lambda s: (0, 0)),      # b1 (padded 1x128)
            pl.BlockSpec((F, F), lambda s: (0, 0)),      # W2
            pl.BlockSpec((1, F), lambda s: (0, 0)),      # b2
            pl.BlockSpec((F, F), lambda s: (0, 0)),      # W3
            pl.BlockSpec((1, F), lambda s: (0, 0)),      # b3
            pl.BlockSpec((Gc, Nc), lambda s: (0, 0)),    # mean-pool matrix (shared)
            pl.BlockSpec((F, F), lambda s: (0, 0)),      # fused head weight
            pl.BlockSpec((1, F), lambda s: (0, 0)),      # fused head bias
        ],
        out_specs=pl.BlockSpec((Gc, F), lambda s: (s, 0)),
        compiler_params=pltpu.CompilerParams(
            dimension_semantics=("parallel",)),
        cost_estimate=pl.CostEstimate(flops=flops, transcendentals=0,
                                      bytes_accessed=bytes_accessed),
    )(a_chunk, x_nodes, w1, b1, w2, b2, w3, b3, pool_chunk, wh, bh)

    policy = heads[:, :num_outputs]
    value = heads[:, num_outputs:num_outputs + 1]
    return policy, value


def reference_forward(a_chunk, x_nodes, pool_chunk, params, num_steps):
    """Pure-JAX reference with identical bf16 cast points / chunk layout."""
    w1, b1, w2, b2, w3, b3, wh, bh = params
    Nc = a_chunk.shape[0]

    def layer(h_bf16, w, b):
        h = jnp.dot(h_bf16, w, preferred_element_type=jnp.float32)
        h = jnp.dot(a_chunk, h.astype(jnp.bfloat16),
                    preferred_element_type=jnp.float32) + b
        return jnp.maximum(h, 0.0)

    outs = []
    for s in range(num_steps):
        x = x_nodes[s * Nc:(s + 1) * Nc]
        h = layer(x, w1, b1)
        h = layer(h.astype(jnp.bfloat16), w2, b2)
        h = layer(h.astype(jnp.bfloat16), w3, b3)
        g = jnp.dot(pool_chunk, h.astype(jnp.bfloat16),
                    preferred_element_type=jnp.float32)
        outs.append(jnp.dot(g.astype(jnp.bfloat16), wh,
                            preferred_element_type=jnp.float32) + bh)
    return jnp.concatenate(outs, axis=0)


def build_graph(num_graphs, nodes_per_graph):
    """One observation: deterministic ring graphs; dense A_hat + mean-pool matrix."""
    N = num_graphs * nodes_per_graph
    A = np.zeros((N, N), dtype=np.float32)
    batch = np.zeros((N,), dtype=np.int32)
    for g in range(num_graphs):
        base = g * nodes_per_graph
        for i in range(nodes_per_graph):
            src = base + i
            dst = base + (i + 1) % nodes_per_graph
            A[src, dst] = 1.0
            A[dst, src] = 1.0
            batch[src] = g
    A = A + np.eye(N, dtype=np.float32)            # self loops (GCNConv default)
    d_inv_sqrt = 1.0 / np.sqrt(A.sum(axis=1))
    A_hat = d_inv_sqrt[:, None] * A * d_inv_sqrt[None, :]
    pool = np.zeros((num_graphs, N), dtype=np.float32)
    for g in range(num_graphs):
        mask = (batch == g)
        pool[g, mask] = 1.0 / mask.sum()
    return A_hat, pool


def build_chunk(a_obs, pool_obs, chunk):
    """Block-diagonal A_hat / pooling matrix covering `chunk` observations."""
    N = a_obs.shape[0]
    G = pool_obs.shape[0]
    a_chunk = np.zeros((chunk * N, chunk * N), dtype=np.float32)
    pool_chunk = np.zeros((chunk * G, chunk * N), dtype=np.float32)
    for c in range(chunk):
        a_chunk[c * N:(c + 1) * N, c * N:(c + 1) * N] = a_obs
        pool_chunk[c * G:(c + 1) * G, c * N:(c + 1) * N] = pool_obs
    return a_chunk, pool_chunk


def init_params(key, num_outputs):
    """Synthetic parameters, zero-padded to lane-dense 128-wide shapes."""
    ks = jax.random.split(key, 10)

    def lin_w(k, fan_in, fan_out):
        s = 1.0 / np.sqrt(fan_in)
        return jax.random.uniform(k, (fan_in, fan_out), jnp.float32, -s, s)

    def lin_b(k, fan_in, fan_out):
        s = 1.0 / np.sqrt(fan_in)
        return jax.random.uniform(k, (1, fan_out), jnp.float32, -s, s)

    # GCNConv(3,64): pad rows 3->128 and cols 64->128 with zeros (exactly preserved:
    # padded x lanes are zero, padded h lanes stay zero through bias/ReLU).
    w1 = jnp.zeros((F, F), jnp.float32).at[:3, :64].set(lin_w(ks[0], 3, 64))
    b1 = jnp.zeros((1, F), jnp.float32).at[:, :64].set(lin_b(ks[1], 3, 64))
    # GCNConv(64,128): pad rows 64->128 with zeros.
    w2 = jnp.zeros((F, F), jnp.float32).at[:64, :].set(lin_w(ks[2], 64, 128))
    b2 = lin_b(ks[3], 64, 128)
    # GCNConv(128,128)
    w3 = lin_w(ks[4], 128, 128)
    b3 = lin_b(ks[5], 128, 128)
    # policy_fn / value_fn fused into one lane-dense (128,128) head.
    wp = lin_w(ks[6], 128, num_outputs)
    bp = lin_b(ks[7], 128, num_outputs)
    wv = lin_w(ks[8], 128, 1)
    bv = lin_b(ks[9], 128, 1)
    wh = jnp.zeros((F, F), jnp.float32).at[:, :num_outputs].set(wp)
    wh = wh.at[:, num_outputs:num_outputs + 1].set(wv)
    bh = jnp.zeros((1, F), jnp.float32).at[:, :num_outputs].set(bp)
    bh = bh.at[:, num_outputs:num_outputs + 1].set(bv)
    return (w1, b1, w2, b2, w3, b3, wh, bh)


if __name__ == "__main__":
    NODES_PER_GRAPH = 8
    NUM_GRAPHS = 2                              # graphs per observation
    N_OBS = NODES_PER_GRAPH * NUM_GRAPHS        # 16 nodes per observation
    CHUNK = 16                                  # observations packed per grid step
    NUM_STEPS = 4                               # grid length ("parallel" axis)
    NUM_OBS = CHUNK * NUM_STEPS                 # 64 observations per call
    F_IN = 3
    NUM_OUTPUTS = 5                             # pursuit action-space size

    key = jax.random.PRNGKey(0)
    k_x, k_p = jax.random.split(key)

    a_obs, pool_obs = build_graph(NUM_GRAPHS, NODES_PER_GRAPH)      # (16,16), (2,16)
    a_chunk_np, pool_chunk_np = build_chunk(a_obs, pool_obs, CHUNK)  # (256,256), (32,256)
    a_chunk = jnp.asarray(a_chunk_np, jnp.bfloat16)
    pool_chunk = jnp.asarray(pool_chunk_np, jnp.bfloat16)

    # node features (env obs->graph preprocessing is upstream); pad 3 -> 128 lanes.
    total_nodes = NUM_OBS * N_OBS
    x_raw = jax.random.normal(k_x, (total_nodes, F_IN), jnp.float32)
    x = jnp.zeros((total_nodes, F), jnp.float32).at[:, :F_IN].set(x_raw)
    x = x.astype(jnp.bfloat16)

    w1, b1, w2, b2, w3, b3, wh, bh = init_params(k_p, NUM_OUTPUTS)
    kparams = (w1.astype(jnp.bfloat16), b1, w2.astype(jnp.bfloat16), b2,
               w3.astype(jnp.bfloat16), b3, wh.astype(jnp.bfloat16), bh)

    policy_out, value_out = pursuit_gnn_forward(
        a_chunk, x, pool_chunk, kparams, num_outputs=NUM_OUTPUTS)
    jax.block_until_ready((policy_out, value_out))

    # pure-JAX reference with identical bf16 operands / cast points
    heads_ref = reference_forward(a_chunk, x, pool_chunk, kparams, NUM_STEPS)
    pol_ref = heads_ref[:, :NUM_OUTPUTS]
    val_ref = heads_ref[:, NUM_OUTPUTS:NUM_OUTPUTS + 1]

    assert policy_out.shape == (NUM_OBS * NUM_GRAPHS, NUM_OUTPUTS)
    assert value_out.reshape(-1).shape == (NUM_OBS * NUM_GRAPHS,)
    assert jnp.allclose(policy_out, pol_ref, atol=1e-2, rtol=1e-2), "policy mismatch"
    assert jnp.allclose(value_out, val_ref, atol=1e-2, rtol=1e-2), "value mismatch"

    print("KERNEL_OK")
</pallas_src>

<mosaic_0001>
module attributes {stable_mosaic.version = 11 : i64} {
  func.func @_pursuit_gnn_kernel(%arg0: i32, %arg1: memref<256x256xbf16, #tpu.memory_space<vmem>>, %arg2: memref<256x128xbf16, #tpu.memory_space<vmem>>, %arg3: memref<128x128xbf16, #tpu.memory_space<vmem>>, %arg4: memref<1x128xf32, #tpu.memory_space<vmem>>, %arg5: memref<128x128xbf16, #tpu.memory_space<vmem>>, %arg6: memref<1x128xf32, #tpu.memory_space<vmem>>, %arg7: memref<128x128xbf16, #tpu.memory_space<vmem>>, %arg8: memref<1x128xf32, #tpu.memory_space<vmem>>, %arg9: memref<32x256xbf16, #tpu.memory_space<vmem>>, %arg10: memref<128x128xbf16, #tpu.memory_space<vmem>>, %arg11: memref<1x128xf32, #tpu.memory_space<vmem>>, %arg12: memref<32x128xf32, #tpu.memory_space<vmem>>) attributes {dimension_semantics = [#tpu.dimension_semantics<parallel>], iteration_bounds = array<i64: 4>, scalar_prefetch = 0 : i64, scratch_operands = 0 : i64, tpu.core_type = #tpu.core_type<tc>, window_params = [{pipeline_mode = #tpu.pipeline_mode<synchronous>, transform_indices = @transform_0, window_bounds = array<i64: 256, 256>}, {transform_indices = @transform_1, window_bounds = array<i64: 256, 128>}, {pipeline_mode = #tpu.pipeline_mode<synchronous>, transform_indices = @transform_2, window_bounds = array<i64: 128, 128>}, {pipeline_mode = #tpu.pipeline_mode<synchronous>, transform_indices = @transform_3, window_bounds = array<i64: 1, 128>}, {pipeline_mode = #tpu.pipeline_mode<synchronous>, transform_indices = @transform_4, window_bounds = array<i64: 128, 128>}, {pipeline_mode = #tpu.pipeline_mode<synchronous>, transform_indices = @transform_5, window_bounds = array<i64: 1, 128>}, {pipeline_mode = #tpu.pipeline_mode<synchronous>, transform_indices = @transform_6, window_bounds = array<i64: 128, 128>}, {pipeline_mode = #tpu.pipeline_mode<synchronous>, transform_indices = @transform_7, window_bounds = array<i64: 1, 128>}, {pipeline_mode = #tpu.pipeline_mode<synchronous>, transform_indices = @transform_8, window_bounds = array<i64: 32, 256>}, {pipeline_mode = #tpu.pipeline_mode<synchronous>, transform_indices = @transform_9, window_bounds = array<i64: 128, 128>}, {pipeline_mode = #tpu.pipeline_mode<synchronous>, transform_indices = @transform_10, window_bounds = array<i64: 1, 128>}, {transform_indices = @transform_11, window_bounds = array<i64: 32, 128>}]} {
    %c0 = arith.constant 0 : index
    %c0_0 = arith.constant 0 : index
    %0 = vector.load %arg1[%c0, %c0_0] : memref<256x256xbf16, #tpu.memory_space<vmem>>, vector<256x256xbf16>
    %c0_1 = arith.constant 0 : index
    %c0_2 = arith.constant 0 : index
    %1 = vector.load %arg2[%c0_1, %c0_2] : memref<256x128xbf16, #tpu.memory_space<vmem>>, vector<256x128xbf16>
    %c0_3 = arith.constant 0 : index
    %c0_4 = arith.constant 0 : index
    %2 = vector.load %arg3[%c0_3, %c0_4] : memref<128x128xbf16, #tpu.memory_space<vmem>>, vector<128x128xbf16>
    %cst = arith.constant dense<0.000000e+00> : vector<256x128xf32>
    %3 = tpu.matmul %1, %2, %cst {dimension_numbers = #tpu.dot_dimension_numbers<[1], [0], [0], [1], [0, 0, 1, 1], [], []>} : vector<256x128xbf16>, vector<128x128xbf16>, vector<256x128xf32> -> vector<256x128xf32>
    %4 = arith.truncf %3 : vector<256x128xf32> to vector<256x128xbf16>
    %cst_5 = arith.constant dense<0.000000e+00> : vector<256x128xf32>
    %5 = tpu.matmul %0, %4, %cst_5 {dimension_numbers = #tpu.dot_dimension_numbers<[1], [0], [0], [1], [0, 0, 1, 1], [], []>} : vector<256x256xbf16>, vector<256x128xbf16>, vector<256x128xf32> -> vector<256x128xf32>
    %c0_6 = arith.constant 0 : index
    %c0_7 = arith.constant 0 : index
    %6 = vector.load %arg4[%c0_6, %c0_7] : memref<1x128xf32, #tpu.memory_space<vmem>>, vector<1x128xf32>
    %7 = vector.broadcast %6 : vector<1x128xf32> to vector<256x128xf32>
    %8 = arith.addf %5, %7 : vector<256x128xf32>
    %cst_8 = arith.constant 0.000000e+00 : f32
    %9 = vector.broadcast %cst_8 : f32 to vector<256x128xf32>
    %10 = arith.maximumf %8, %9 : vector<256x128xf32>
    %11 = arith.truncf %10 : vector<256x128xf32> to vector<256x128xbf16>
    %c0_9 = arith.constant 0 : index
    %c0_10 = arith.constant 0 : index
    %12 = vector.load %arg5[%c0_9, %c0_10] : memref<128x128xbf16, #tpu.memory_space<vmem>>, vector<128x128xbf16>
    %cst_11 = arith.constant dense<0.000000e+00> : vector<256x128xf32>
    %13 = tpu.matmul %11, %12, %cst_11 {dimension_numbers = #tpu.dot_dimension_numbers<[1], [0], [0], [1], [0, 0, 1, 1], [], []>} : vector<256x128xbf16>, vector<128x128xbf16>, vector<256x128xf32> -> vector<256x128xf32>
    %14 = arith.truncf %13 : vector<256x128xf32> to vector<256x128xbf16>
    %cst_12 = arith.constant dense<0.000000e+00> : vector<256x128xf32>
    %15 = tpu.matmul %0, %14, %cst_12 {dimension_numbers = #tpu.dot_dimension_numbers<[1], [0], [0], [1], [0, 0, 1, 1], [], []>} : vector<256x256xbf16>, vector<256x128xbf16>, vector<256x128xf32> -> vector<256x128xf32>
    %c0_13 = arith.constant 0 : index
    %c0_14 = arith.constant 0 : index
    %16 = vector.load %arg6[%c0_13, %c0_14] : memref<1x128xf32, #tpu.memory_space<vmem>>, vector<1x128xf32>
    %17 = vector.broadcast %16 : vector<1x128xf32> to vector<256x128xf32>
    %18 = arith.addf %15, %17 : vector<256x128xf32>
    %cst_15 = arith.constant 0.000000e+00 : f32
    %19 = vector.broadcast %cst_15 : f32 to vector<256x128xf32>
    %20 = arith.maximumf %18, %19 : vector<256x128xf32>
    %21 = arith.truncf %20 : vector<256x128xf32> to vector<256x128xbf16>
    %c0_16 = arith.constant 0 : index
    %c0_17 = arith.constant 0 : index
    %22 = vector.load %arg7[%c0_16, %c0_17] : memref<128x128xbf16, #tpu.memory_space<vmem>>, vector<128x128xbf16>
    %cst_18 = arith.constant dense<0.000000e+00> : vector<256x128xf32>
    %23 = tpu.matmul %21, %22, %cst_18 {dimension_numbers = #tpu.dot_dimension_numbers<[1], [0], [0], [1], [0, 0, 1, 1], [], []>} : vector<256x128xbf16>, vector<128x128xbf16>, vector<256x128xf32> -> vector<256x128xf32>
    %24 = arith.truncf %23 : vector<256x128xf32> to vector<256x128xbf16>
    %cst_19 = arith.constant dense<0.000000e+00> : vector<256x128xf32>
    %25 = tpu.matmul %0, %24, %cst_19 {dimension_numbers = #tpu.dot_dimension_numbers<[1], [0], [0], [1], [0, 0, 1, 1], [], []>} : vector<256x256xbf16>, vector<256x128xbf16>, vector<256x128xf32> -> vector<256x128xf32>
    %c0_20 = arith.constant 0 : index
    %c0_21 = arith.constant 0 : index
    %26 = vector.load %arg8[%c0_20, %c0_21] : memref<1x128xf32, #tpu.memory_space<vmem>>, vector<1x128xf32>
    %27 = vector.broadcast %26 : vector<1x128xf32> to vector<256x128xf32>
    %28 = arith.addf %25, %27 : vector<256x128xf32>
    %cst_22 = arith.constant 0.000000e+00 : f32
    %29 = vector.broadcast %cst_22 : f32 to vector<256x128xf32>
    %30 = arith.maximumf %28, %29 : vector<256x128xf32>
    %c0_23 = arith.constant 0 : index
    %c0_24 = arith.constant 0 : index
    %31 = vector.load %arg9[%c0_23, %c0_24] : memref<32x256xbf16, #tpu.memory_space<vmem>>, vector<32x256xbf16>
    %32 = arith.truncf %30 : vector<256x128xf32> to vector<256x128xbf16>
    %cst_25 = arith.constant dense<0.000000e+00> : vector<32x128xf32>
    %33 = tpu.matmul %31, %32, %cst_25 {dimension_numbers = #tpu.dot_dimension_numbers<[1], [0], [0], [1], [0, 0, 1, 1], [], []>} : vector<32x256xbf16>, vector<256x128xbf16>, vector<32x128xf32> -> vector<32x128xf32>
    %34 = arith.truncf %33 : vector<32x128xf32> to vector<32x128xbf16>
    %c0_26 = arith.constant 0 : index
    %c0_27 = arith.constant 0 : index
    %35 = vector.load %arg10[%c0_26, %c0_27] : memref<128x128xbf16, #tpu.memory_space<vmem>>, vector<128x128xbf16>
    %cst_28 = arith.constant dense<0.000000e+00> : vector<32x128xf32>
    %36 = tpu.matmul %34, %35, %cst_28 {dimension_numbers = #tpu.dot_dimension_numbers<[1], [0], [0], [1], [0, 0, 1, 1], [], []>} : vector<32x128xbf16>, vector<128x128xbf16>, vector<32x128xf32> -> vector<32x128xf32>
    %c0_29 = arith.constant 0 : index
    %c0_30 = arith.constant 0 : index
    %37 = vector.load %arg11[%c0_29, %c0_30] : memref<1x128xf32, #tpu.memory_space<vmem>>, vector<1x128xf32>
    %38 = vector.broadcast %37 : vector<1x128xf32> to vector<32x128xf32>
    %39 = arith.addf %36, %38 : vector<32x128xf32>
    %c0_31 = arith.constant 0 : index
    %c0_32 = arith.constant 0 : index
    %40 = vector.load %arg12[%c0_31, %c0_32] : memref<32x128xf32, #tpu.memory_space<vmem>>, vector<32x128xf32>
    tpu.vector_store %arg12[%c0_31, %c0_32], %39 {strides = array<i32>} : memref<32x128xf32, #tpu.memory_space<vmem>>, vector<32x128xf32>,
    return
  }
  func.func @transform_0(%arg0: i32) -> (i32, i32) {
    %c0_i32 = arith.constant 0 : i32
    %c0_i32_0 = arith.constant 0 : i32
    %c0_i32_1 = arith.constant 0 : i32
    return %c0_i32, %c0_i32_0 : i32, i32
  }
  func.func @transform_1(%arg0: i32) -> (i32, i32) {
    %c0_i32 = arith.constant 0 : i32
    %c0_i32_0 = arith.constant 0 : i32
    return %arg0, %c0_i32 : i32, i32
  }
  func.func @transform_2(%arg0: i32) -> (i32, i32) {
    %c0_i32 = arith.constant 0 : i32
    %c0_i32_0 = arith.constant 0 : i32
    %c0_i32_1 = arith.constant 0 : i32
    return %c0_i32, %c0_i32_0 : i32, i32
  }
  func.func @transform_3(%arg0: i32) -> (i32, i32) {
    %c0_i32 = arith.constant 0 : i32
    %c0_i32_0 = arith.constant 0 : i32
    %c0_i32_1 = arith.constant 0 : i32
    return %c0_i32, %c0_i32_0 : i32, i32
  }
  func.func @transform_4(%arg0: i32) -> (i32, i32) {
    %c0_i32 = arith.constant 0 : i32
    %c0_i32_0 = arith.constant 0 : i32
    %c0_i32_1 = arith.constant 0 : i32
    return %c0_i32, %c0_i32_0 : i32, i32
  }
  func.func @transform_5(%arg0: i32) -> (i32, i32) {
    %c0_i32 = arith.constant 0 : i32
    %c0_i32_0 = arith.constant 0 : i32
    %c0_i32_1 = arith.constant 0 : i32
    return %c0_i32, %c0_i32_0 : i32, i32
  }
  func.func @transform_6(%arg0: i32) -> (i32, i32) {
    %c0_i32 = arith.constant 0 : i32
    %c0_i32_0 = arith.constant 0 : i32
    %c0_i32_1 = arith.constant 0 : i32
    return %c0_i32, %c0_i32_0 : i32, i32
  }
  func.func @transform_7(%arg0: i32) -> (i32, i32) {
    %c0_i32 = arith.constant 0 : i32
    %c0_i32_0 = arith.constant 0 : i32
    %c0_i32_1 = arith.constant 0 : i32
    return %c0_i32, %c0_i32_0 : i32, i32
  }
  func.func @transform_8(%arg0: i32) -> (i32, i32) {
    %c0_i32 = arith.constant 0 : i32
    %c0_i32_0 = arith.constant 0 : i32
    %c0_i32_1 = arith.constant 0 : i32
    return %c0_i32, %c0_i32_0 : i32, i32
  }
  func.func @transform_9(%arg0: i32) -> (i32, i32) {
    %c0_i32 = arith.constant 0 : i32
    %c0_i32_0 = arith.constant 0 : i32
    %c0_i32_1 = arith.constant 0 : i32
    return %c0_i32, %c0_i32_0 : i32, i32
  }
  func.func @transform_10(%arg0: i32) -> (i32, i32) {
    %c0_i32 = arith.constant 0 : i32
    %c0_i32_0 = arith.constant 0 : i32
    %c0_i32_1 = arith.constant 0 : i32
    return %c0_i32, %c0_i32_0 : i32, i32
  }
  func.func @transform_11(%arg0: i32) -> (i32, i32) {
    %c0_i32 = arith.constant 0 : i32
    %c0_i32_0 = arith.constant 0 : i32
    return %arg0, %c0_i32 : i32, i32
  }
}

</mosaic_0001>

<llo_original>
// kernel: tpu_custom_call.1
$region0: #{tpu_custom_call.1}
  #allocation0 [shape = 'u32[]', space=smem, size = 0x4, offset = 0x4, fixed_abs, tag = 'smem constant byte address 0x4 - core index']
  #allocation1 [shape = 'u32[144,128]{1,0:T(1,128)}', space=vmem, size = 0x12000, scoped, tag = 'internal scratch']
  %s0 = inlined_call_operand.hbm [shape: bf16[256,256], index: 0, kind: input, shape index: {}]
  %s1 = inlined_call_operand.hbm [shape: bf16[1024,128], index: 1, kind: input, shape index: {}]
  %s2 = inlined_call_operand.hbm [shape: bf16[128,128], index: 2, kind: input, shape index: {}]
  %s3 = inlined_call_operand.vmem [shape: f32[1,128], index: 3, kind: input, shape index: {}]
  %s4 = inlined_call_operand.hbm [shape: bf16[128,128], index: 4, kind: input, shape index: {}]
  %s5 = inlined_call_operand.vmem [shape: f32[1,128], index: 5, kind: input, shape index: {}]
  %s6 = inlined_call_operand.hbm [shape: bf16[128,128], index: 6, kind: input, shape index: {}]
  %s7 = inlined_call_operand.vmem [shape: f32[1,128], index: 7, kind: input, shape index: {}]
  %s8 = inlined_call_operand.hbm [shape: bf16[32,256], index: 8, kind: input, shape index: {}]
  %s9 = inlined_call_operand.hbm [shape: bf16[128,128], index: 9, kind: input, shape index: {}]
  %s10 = inlined_call_operand.vmem [shape: f32[1,128], index: 10, kind: input, shape index: {}]
  %s11 = inlined_call_operand.hbm [shape: f32[128,128], index: 11, kind: output, shape index: {}]
  %s12 = sld [smem:[#allocation0]]
  $region105: #{tpu_custom_call.1} parent=0
    _
  %s14 = ssub.s32 1, %s12
  %s15 = scalar_select 0, %s14, %s12
  $region1: #{tpu_custom_call.1} parent=0
    #allocation2 [shape = 'u8[131072]{0}', space=vmem, size = 0x20000, scoped, tag = 'input window, operand 0, single buffered']
    #allocation3 [shape = 's32[2]{0}', space=sflag, size = 0x8, scoped, tag = 'scoped memory for tpu_custom_call.1']
    #allocation4 [shape = 's32[2]{0}', space=sflag, size = 0x8, scoped, tag = 'scoped memory for tpu_custom_call.1']
    #allocation5 [shape = 'u8[131072]{0}', space=vmem, size = 0x20000, scoped, tag = 'input window, operand 1']
    #allocation6 [shape = 's32[2]{0}', space=sflag, size = 0x8, scoped, tag = 'scoped memory for tpu_custom_call.1']
    #allocation7 [shape = 'u8[32768]{0}', space=vmem, size = 0x8000, scoped, tag = 'input window, operand 2, single buffered']
    #allocation8 [shape = 'u8[32768]{0}', space=vmem, size = 0x8000, scoped, tag = 'input window, operand 4, single buffered']
    #allocation9 [shape = 's32[1]{0}', space=sflag, size = 0x4, scoped, tag = 'scoped memory for tpu_custom_call.1']
    #allocation10 [shape = 'u8[32768]{0}', space=vmem, size = 0x8000, scoped, tag = 'input window, operand 6, single buffered']
    #allocation11 [shape = 'u8[16384]{0}', space=vmem, size = 0x4000, scoped, tag = 'input window, operand 8, single buffered']
    #allocation12 [shape = 's32[1]{0}', space=sflag, size = 0x4, scoped, tag = 'scoped memory for tpu_custom_call.1']
    #allocation13 [shape = 'u8[32768]{0}', space=vmem, size = 0x8000, scoped, tag = 'input window, operand 9, single buffered']
    #allocation14 [shape = 'u8[32768]{0}', space=vmem, size = 0x8000, scoped, tag = 'output window, operand 0']
    %16 = vsyncpa [#allocation3], 0
    %17 = vsyncpa [#allocation6], 0
    %s18 = scalar_lea.sflag [#allocation6], 1
    %19 = vsyncpa %s18, 0
    %20 = vsyncpa [#allocation9], 0
    %21 = vsyncpa [#allocation12], 0
    %22 = vsyncpa [#allocation4], 0
    %s23 = scalar_lea.sflag [#allocation4], 1
    %24 = vsyncpa %s23, 0
    loop: start=0, step=1, limit=6
    $region2: #{tpu_custom_call.1} parent=1 // loop_pre_header
      _
    $region3: #{tpu_custom_call.1} parent=1 // loop_header
      %s26 = sphi 0, %s30
      %p27 = scmp.ge.s32.totalorder %s26, 6
      %s34 = sphi 0, %s34
      %s36 = sphi 0, %s34
      %s37 = sphi 0, %s36
      %s51 = sphi 0, %s37
      %s57 = sphi 0, %s59
      %s60 = sphi 0, %s57
      %s61 = sphi 0, %s60
      %s77 = sphi 0, %s61
      %s81 = sphi 0, %s81
      %s83 = sphi 0, %s81
      %s84 = sphi 0, %s83
      %s98 = sphi 0, %s84
      %s102 = sphi 0, %s102
      %s104 = sphi 0, %s102
      %s105 = sphi 0, %s104
      %s119 = sphi 0, %s105
      %s123 = sphi 0, %s123
      %s125 = sphi 0, %s123
      %s126 = sphi 0, %s125
      %s140 = sphi 0, %s126
      %s144 = sphi 0, %s144
      %s146 = sphi 0, %s144
      %s147 = sphi 0, %s146
      %s161 = sphi 0, %s147
      %s165 = sphi 0, %s165
      %s167 = sphi 0, %s165
      %s168 = sphi 0, %s167
      %s182 = sphi 0, %s168
      %s186 = sphi 0, %s186
      %s188 = sphi 0, %s186
      %s189 = sphi 0, %s188
      %s203 = sphi 0, %s189
      %s207 = sphi 0, %s207
      %s209 = sphi 0, %s207
      %s210 = sphi 0, %s209
      %s224 = sphi 0, %s210
      %s228 = sphi 0, %s228
      %s230 = sphi 0, %s228
      %s231 = sphi 0, %s230
      %s245 = sphi 0, %s231
      %s249 = sphi 0, %s249
      %s251 = sphi 0, %s249
      %s252 = sphi 0, %s251
      %s266 = sphi 0, %s252
      %s272 = sphi 0, %s274
      %s275 = sphi 0, %s272
      %s276 = sphi 0, %s275
      %s292 = sphi 0, %s276
    $region4: #{tpu_custom_call.1} parent=1 // loop_header_branch
      %29 = sbr.rel (%p27) target = $region8
    $region5: #{tpu_custom_call.1} parent=1 // loop_body
      %s31 = ssub.s32 %s26, 1
      %s32 = ssub.s32 %s26, 2
      %s33 = sadd.s32 %s26, 1
      %s35 = sadd.s32 %s34, 1
      %p38 = scmp.eq.s32.totalorder %s26, 3
      %p39 = scmp.ne.s32.totalorder %s34, %s36
      %p40 = scmp.eq.s32.totalorder %s26, 0
      %p41 = por %p39, %p40
      %p42 = scmp.ne.s32.totalorder %s34, %s36
      %p43 = scmp.eq.s32.totalorder %s31, 3
      %p44 = por %p42, %p43
      %p45 = scmp.ne.s32.totalorder %s36, %s37
      %p46 = scmp.eq.s32.totalorder %s31, 0
      %p47 = por %p45, %p46
      %p48 = scmp.ne.s32.totalorder %s36, %s37
      %p49 = scmp.eq.s32.totalorder %s32, 3
      %p50 = por %p48, %p49
      %p52 = scmp.ne.s32.totalorder %s37, %s51
      %p53 = scmp.eq.s32.totalorder %s32, 0
      %p54 = por %p52, %p53
      %s55 = ssub.s32 %s26, %s33
      %p56 = scmp.eq.s32.totalorder %s55, 0
      %s58 = sadd.s32 %s57, 1
      %s59 = scalar_select %p56, %s57, %s58
      %p62 = pneg %p56
      %p63 = scmp.eq.s32.totalorder %s26, 3
      %p64 = por %p62, %p63
      %p65 = scmp.ne.s32.totalorder %s57, %s60
      %p66 = scmp.eq.s32.totalorder %s26, 0
      %p67 = por %p65, %p66
      %p68 = scmp.ne.s32.totalorder %s57, %s60
      %p69 = scmp.eq.s32.totalorder %s31, 3
      %p70 = por %p68, %p69
      %p71 = scmp.ne.s32.totalorder %s60, %s61
      %p72 = scmp.eq.s32.totalorder %s31, 0
      %p73 = por %p71, %p72
      %p74 = scmp.ne.s32.totalorder %s60, %s61
      %p75 = scmp.eq.s32.totalorder %s32, 3
      %p76 = por %p74, %p75
      %p78 = scmp.ne.s32.totalorder %s61, %s77
      %p79 = scmp.eq.s32.totalorder %s32, 0
      %p80 = por %p78, %p79
      %s82 = sadd.s32 %s81, 1
      %p85 = scmp.eq.s32.totalorder %s26, 3
      %p86 = scmp.ne.s32.totalorder %s81, %s83
      %p87 = scmp.eq.s32.totalorder %s26, 0
      %p88 = por %p86, %p87
      %p89 = scmp.ne.s32.totalorder %s81, %s83
      %p90 = scmp.eq.s32.totalorder %s31, 3
      %p91 = por %p89, %p90
      %p92 = scmp.ne.s32.totalorder %s83, %s84
      %p93 = scmp.eq.s32.totalorder %s31, 0
      %p94 = por %p92, %p93
      %p95 = scmp.ne.s32.totalorder %s83, %s84
      %p96 = scmp.eq.s32.totalorder %s32, 3
      %p97 = por %p95, %p96
      %p99 = scmp.ne.s32.totalorder %s84, %s98
      %p100 = scmp.eq.s32.totalorder %s32, 0
      %p101 = por %p99, %p100
      %s103 = sadd.s32 %s102, 1
      %p106 = scmp.eq.s32.totalorder %s26, 3
      %p107 = scmp.ne.s32.totalorder %s102, %s104
      %p108 = scmp.eq.s32.totalorder %s26, 0
      %p109 = por %p107, %p108
      %p110 = scmp.ne.s32.totalorder %s102, %s104
      %p111 = scmp.eq.s32.totalorder %s31, 3
      %p112 = por %p110, %p111
      %p113 = scmp.ne.s32.totalorder %s104, %s105
      %p114 = scmp.eq.s32.totalorder %s31, 0
      %p115 = por %p113, %p114
      %p116 = scmp.ne.s32.totalorder %s104, %s105
      %p117 = scmp.eq.s32.totalorder %s32, 3
      %p118 = por %p116, %p117
      %p120 = scmp.ne.s32.totalorder %s105, %s119
      %p121 = scmp.eq.s32.totalorder %s32, 0
      %p122 = por %p120, %p121
      %s124 = sadd.s32 %s123, 1
      %p127 = scmp.eq.s32.totalorder %s26, 3
      %p128 = scmp.ne.s32.totalorder %s123, %s125
      %p129 = scmp.eq.s32.totalorder %s26, 0
      %p130 = por %p128, %p129
      %p131 = scmp.ne.s32.totalorder %s123, %s125
      %p132 = scmp.eq.s32.totalorder %s31, 3
      %p133 = por %p131, %p132
      %p134 = scmp.ne.s32.totalorder %s125, %s126
      %p135 = scmp.eq.s32.totalorder %s31, 0
      %p136 = por %p134, %p135
      %p137 = scmp.ne.s32.totalorder %s125, %s126
      %p138 = scmp.eq.s32.totalorder %s32, 3
      %p139 = por %p137, %p138
      %p141 = scmp.ne.s32.totalorder %s126, %s140
      %p142 = scmp.eq.s32.totalorder %s32, 0
      %p143 = por %p141, %p142
      %s145 = sadd.s32 %s144, 1
      %p148 = scmp.eq.s32.totalorder %s26, 3
      %p149 = scmp.ne.s32.totalorder %s144, %s146
      %p150 = scmp.eq.s32.totalorder %s26, 0
      %p151 = por %p149, %p150
      %p152 = scmp.ne.s32.totalorder %s144, %s146
      %p153 = scmp.eq.s32.totalorder %s31, 3
      %p154 = por %p152, %p153
      %p155 = scmp.ne.s32.totalorder %s146, %s147
      %p156 = scmp.eq.s32.totalorder %s31, 0
      %p157 = por %p155, %p156
      %p158 = scmp.ne.s32.totalorder %s146, %s147
      %p159 = scmp.eq.s32.totalorder %s32, 3
      %p160 = por %p158, %p159
      %p162 = scmp.ne.s32.totalorder %s147, %s161
      %p163 = scmp.eq.s32.totalorder %s32, 0
      %p164 = por %p162, %p163
      %s166 = sadd.s32 %s165, 1
      %p169 = scmp.eq.s32.totalorder %s26, 3
      %p170 = scmp.ne.s32.totalorder %s165, %s167
      %p171 = scmp.eq.s32.totalorder %s26, 0
      %p172 = por %p170, %p171
      %p173 = scmp.ne.s32.totalorder %s165, %s167
      %p174 = scmp.eq.s32.totalorder %s31, 3
      %p175 = por %p173, %p174
      %p176 = scmp.ne.s32.totalorder %s167, %s168
      %p177 = scmp.eq.s32.totalorder %s31, 0
      %p178 = por %p176, %p177
      %p179 = scmp.ne.s32.totalorder %s167, %s168
      %p180 = scmp.eq.s32.totalorder %s32, 3
      %p181 = por %p179, %p180
      %p183 = scmp.ne.s32.totalorder %s168, %s182
      %p184 = scmp.eq.s32.totalorder %s32, 0
      %p185 = por %p183, %p184
      %s187 = sadd.s32 %s186, 1
      %p190 = scmp.eq.s32.totalorder %s26, 3
      %p191 = scmp.ne.s32.totalorder %s186, %s188
      %p192 = scmp.eq.s32.totalorder %s26, 0
      %p193 = por %p191, %p192
      %p194 = scmp.ne.s32.totalorder %s186, %s188
      %p195 = scmp.eq.s32.totalorder %s31, 3
      %p196 = por %p194, %p195
      %p197 = scmp.ne.s32.totalorder %s188, %s189
      %p198 = scmp.eq.s32.totalorder %s31, 0
      %p199 = por %p197, %p198
      %p200 = scmp.ne.s32.totalorder %s188, %s189
      %p201 = scmp.eq.s32.totalorder %s32, 3
      %p202 = por %p200, %p201
      %p204 = scmp.ne.s32.totalorder %s189, %s203
      %p205 = scmp.eq.s32.totalorder %s32, 0
      %p206 = por %p204, %p205
      %s208 = sadd.s32 %s207, 1
      %p211 = scmp.eq.s32.totalorder %s26, 3
      %p212 = scmp.ne.s32.totalorder %s207, %s209
      %p213 = scmp.eq.s32.totalorder %s26, 0
      %p214 = por %p212, %p213
      %p215 = scmp.ne.s32.totalorder %s207, %s209
      %p216 = scmp.eq.s32.totalorder %s31, 3
      %p217 = por %p215, %p216
      %p218 = scmp.ne.s32.totalorder %s209, %s210
      %p219 = scmp.eq.s32.totalorder %s31, 0
      %p220 = por %p218, %p219
      %p221 = scmp.ne.s32.totalorder %s209, %s210
      %p222 = scmp.eq.s32.totalorder %s32, 3
      %p223 = por %p221, %p222
      %p225 = scmp.ne.s32.totalorder %s210, %s224
      %p226 = scmp.eq.s32.totalorder %s32, 0
      %p227 = por %p225, %p226
      %s229 = sadd.s32 %s228, 1
      %p232 = scmp.eq.s32.totalorder %s26, 3
      %p233 = scmp.ne.s32.totalorder %s228, %s230
      %p234 = scmp.eq.s32.totalorder %s26, 0
      %p235 = por %p233, %p234
      %p236 = scmp.ne.s32.totalorder %s228, %s230
      %p237 = scmp.eq.s32.totalorder %s31, 3
      %p238 = por %p236, %p237
      %p239 = scmp.ne.s32.totalorder %s230, %s231
      %p240 = scmp.eq.s32.totalorder %s31, 0
      %p241 = por %p239, %p240
      %p242 = scmp.ne.s32.totalorder %s230, %s231
      %p243 = scmp.eq.s32.totalorder %s32, 3
      %p244 = por %p242, %p243
      %p246 = scmp.ne.s32.totalorder %s231, %s245
      %p247 = scmp.eq.s32.totalorder %s32, 0
      %p248 = por %p246, %p247
      %s250 = sadd.s32 %s249, 1
      %p253 = scmp.eq.s32.totalorder %s26, 3
      %p254 = scmp.ne.s32.totalorder %s249, %s251
      %p255 = scmp.eq.s32.totalorder %s26, 0
      %p256 = por %p254, %p255
      %p257 = scmp.ne.s32.totalorder %s249, %s251
      %p258 = scmp.eq.s32.totalorder %s31, 3
      %p259 = por %p257, %p258
      %p260 = scmp.ne.s32.totalorder %s251, %s252
      %p261 = scmp.eq.s32.totalorder %s31, 0
      %p262 = por %p260, %p261
      %p263 = scmp.ne.s32.totalorder %s251, %s252
      %p264 = scmp.eq.s32.totalorder %s32, 3
      %p265 = por %p263, %p264
      %p267 = scmp.ne.s32.totalorder %s252, %s266
      %p268 = scmp.eq.s32.totalorder %s32, 0
      %p269 = por %p267, %p268
      %s270 = ssub.s32 %s26, %s33
      %p271 = scmp.eq.s32.totalorder %s270, 0
      %s273 = sadd.s32 %s272, 1
      %s274 = scalar_select %p271, %s272, %s273
      %p277 = pneg %p271
      %p278 = scmp.eq.s32.totalorder %s26, 3
      %p279 = por %p277, %p278
      %p280 = scmp.ne.s32.totalorder %s272, %s275
      %p281 = scmp.eq.s32.totalorder %s26, 0
      %p282 = por %p280, %p281
      %p283 = scmp.ne.s32.totalorder %s272, %s275
      %p284 = scmp.eq.s32.totalorder %s31, 3
      %p285 = por %p283, %p284
      %p286 = scmp.ne.s32.totalorder %s275, %s276
      %p287 = scmp.eq.s32.totalorder %s31, 0
      %p288 = por %p286, %p287
      %p289 = scmp.ne.s32.totalorder %s275, %s276
      %p290 = scmp.eq.s32.totalorder %s32, 3
      %p291 = por %p289, %p290
      %p293 = scmp.ne.s32.totalorder %s276, %s292
      %p294 = scmp.eq.s32.totalorder %s32, 0
      %p295 = por %p293, %p294
      %p296 = scmp.le.s32.totalorder 1, %s26
      %p297 = scmp.lt.s32.totalorder %s26, 5
      %p298 = pnand %p296, %p297
      %p299 = pneg %p298
      // Predicated region
      $region9: #{tpu_custom_call.1} parent=5 // pred_check
        _
      $region10: #{tpu_custom_call.1} parent=5 // pred_check_branch
        %301 = sbr.rel (%p298) target = $region12
      $region11: #{tpu_custom_call.1} parent=5 // pred_region
        %s302 = ssub.s32 %s26, 1
        // Predicated region
        $region13: #{tpu_custom_call.1} parent=11 // pred_check
          %p303 = pneg %p47
        $region14: #{tpu_custom_call.1} parent=11 // pred_check_branch
          %305 = sbr.rel (%p303) target = $region16
        $region15: #{tpu_custom_call.1} parent=11 // pred_region
          %s307 = ssub.s32 4096, 4096
          %308 = vsyncadd [#allocation3], %s307
          %s309 = sshll.u32 [#allocation2], 4
          %s310 = int_to_ptr.vmem [resolvable:$true] %s309
          %315 = dma.hbm_to_vmem [thread:$0]  %s0, 4096, %s310, [#allocation3], 128, 128, 8
        $region16: #{tpu_custom_call.1} parent=11 // pred_fallthru
          _
        // Predicated region
        $region17: #{tpu_custom_call.1} parent=11 // pred_check
          %p316 = pneg %p94
        $region18: #{tpu_custom_call.1} parent=11 // pred_check_branch
          %318 = sbr.rel (%p316) target = $region20
        $region19: #{tpu_custom_call.1} parent=11 // pred_region
          %s320 = ssub.s32 1024, 1024
          %321 = vsyncadd [#allocation6], %s320
          %s322 = sshll.u32 [#allocation7], 4
          %s323 = int_to_ptr.vmem [resolvable:$true] %s322
          %328 = dma.hbm_to_vmem [thread:$0]  %s2, 1024, %s323, [#allocation6], 64, 64, 4
        $region20: #{tpu_custom_call.1} parent=11 // pred_fallthru
          _
        // Predicated region
        $region21: #{tpu_custom_call.1} parent=11 // pred_check
          %p329 = pneg %p115
        $region22: #{tpu_custom_call.1} parent=11 // pred_check_branch
          %331 = sbr.rel (%p329) target = $region24
        $region23: #{tpu_custom_call.1} parent=11 // pred_region
          _
        $region24: #{tpu_custom_call.1} parent=11 // pred_fallthru
          _
        // Predicated region
        $region25: #{tpu_custom_call.1} parent=11 // pred_check
          %p332 = pneg %p136
        $region26: #{tpu_custom_call.1} parent=11 // pred_check_branch
          %334 = sbr.rel (%p332) target = $region28
        $region27: #{tpu_custom_call.1} parent=11 // pred_region
          %s336 = ssub.s32 1024, 1024
          %337 = vsyncadd [#allocation9], %s336
          %s338 = sshll.u32 [#allocation8], 4
          %s339 = int_to_ptr.vmem [resolvable:$true] %s338
          %344 = dma.hbm_to_vmem [thread:$0]  %s4, 1024, %s339, [#allocation9], 64, 64, 4
        $region28: #{tpu_custom_call.1} parent=11 // pred_fallthru
          _
        // Predicated region
        $region29: #{tpu_custom_call.1} parent=11 // pred_check
          %p345 = pneg %p157
        $region30: #{tpu_custom_call.1} parent=11 // pred_check_branch
          %347 = sbr.rel (%p345) target = $region32
        $region31: #{tpu_custom_call.1} parent=11 // pred_region
          _
        $region32: #{tpu_custom_call.1} parent=11 // pred_fallthru
          _
        // Predicated region
        $region33: #{tpu_custom_call.1} parent=11 // pred_check
          %p348 = pneg %p178
        $region34: #{tpu_custom_call.1} parent=11 // pred_check_branch
          %350 = sbr.rel (%p348) target = $region36
        $region35: #{tpu_custom_call.1} parent=11 // pred_region
          %s352 = ssub.s32 1024, 1024
          %353 = vsyncadd [#allocation9], %s352
          %s354 = sshll.u32 [#allocation10], 4
          %s355 = int_to_ptr.vmem [resolvable:$true] %s354
          %360 = dma.hbm_to_vmem [thread:$0]  %s6, 1024, %s355, [#allocation9], 64, 64, 4
        $region36: #{tpu_custom_call.1} parent=11 // pred_fallthru
          _
        // Predicated region
        $region37: #{tpu_custom_call.1} parent=11 // pred_check
          %p361 = pneg %p199
        $region38: #{tpu_custom_call.1} parent=11 // pred_check_branch
          %363 = sbr.rel (%p361) target = $region40
        $region39: #{tpu_custom_call.1} parent=11 // pred_region
          _
        $region40: #{tpu_custom_call.1} parent=11 // pred_fallthru
          _
        // Predicated region
        $region41: #{tpu_custom_call.1} parent=11 // pred_check
          %p364 = pneg %p220
        $region42: #{tpu_custom_call.1} parent=11 // pred_check_branch
          %366 = sbr.rel (%p364) target = $region44
        $region43: #{tpu_custom_call.1} parent=11 // pred_region
          %s368 = ssub.s32 512, 512
          %369 = vsyncadd [#allocation12], %s368
          %s370 = sshll.u32 [#allocation11], 4
          %s371 = int_to_ptr.vmem [resolvable:$true] %s370
          %376 = dma.hbm_to_vmem [thread:$0]  %s8, 512, %s371, [#allocation12], 128, 128, 8
        $region44: #{tpu_custom_call.1} parent=11 // pred_fallthru
          _
        // Predicated region
        $region45: #{tpu_custom_call.1} parent=11 // pred_check
          %p377 = pneg %p241
        $region46: #{tpu_custom_call.1} parent=11 // pred_check_branch
          %379 = sbr.rel (%p377) target = $region48
        $region47: #{tpu_custom_call.1} parent=11 // pred_region
          %s381 = ssub.s32 1024, 1024
          %382 = vsyncadd [#allocation12], %s381
          %s383 = sshll.u32 [#allocation13], 4
          %s384 = int_to_ptr.vmem [resolvable:$true] %s383
          %389 = dma.hbm_to_vmem [thread:$0]  %s9, 1024, %s384, [#allocation12], 64, 64, 4
        $region48: #{tpu_custom_call.1} parent=11 // pred_fallthru
          _
        // Predicated region
        $region49: #{tpu_custom_call.1} parent=11 // pred_check
          %p390 = pneg %p262
        $region50: #{tpu_custom_call.1} parent=11 // pred_check_branch
          %392 = sbr.rel (%p390) target = $region52
        $region51: #{tpu_custom_call.1} parent=11 // pred_region
          _
        $region52: #{tpu_custom_call.1} parent=11 // pred_fallthru
          _
      $region12: #{tpu_custom_call.1} parent=5 // pred_fallthru
        _
      %p393 = scmp.lt.s32.totalorder %s26, 4
      // Predicated region
      $region53: #{tpu_custom_call.1} parent=5 // pred_check
        %p394 = pneg %p393
      $region54: #{tpu_custom_call.1} parent=5 // pred_check_branch
        %396 = sbr.rel (%p394) target = $region56
      $region55: #{tpu_custom_call.1} parent=5 // pred_region
        // Predicated region
        $region57: #{tpu_custom_call.1} parent=55 // pred_check
          %p397 = pneg %p67
        $region58: #{tpu_custom_call.1} parent=55 // pred_check_branch
          %399 = sbr.rel (%p397) target = $region60
        $region59: #{tpu_custom_call.1} parent=55 // pred_region
          %s400 = sand.u32 %s26, 1
          %s401 = scalar_lea.sflag [#allocation6], %s400
          %s402 = sand.u32 %s57, 1
          %s403 = smul.addr %s402, 128
          %s404 = scalar_lea.vmem [#allocation5], %s403
          %s405 = smul.u32 32, %s26
          %s407 = ssub.s32 2048, 2048
          %408 = vsyncadd %s401, %s407
          %s409 = smul.addr %s405, 64
          %s410 = scalar_lea.hbm %s1, %s409
          %s411 = sshll.u32 %s404, 4
          %s412 = int_to_ptr.vmem [resolvable:$true] %s411
          %417 = dma.hbm_to_vmem [thread:$0]  %s410, 2048, %s412, %s401, 64, 64, 4
        $region60: #{tpu_custom_call.1} parent=55 // pred_fallthru
          _
      $region56: #{tpu_custom_call.1} parent=5 // pred_fallthru
        _
      %p418 = scmp.le.s32.totalorder 1, %s26
      %p419 = scmp.lt.s32.totalorder %s26, 5
      %p420 = pnand %p418, %p419
      %p421 = pneg %p420
      // Predicated region
      $region61: #{tpu_custom_call.1} parent=5 // pred_check
        _
      $region62: #{tpu_custom_call.1} parent=5 // pred_check_branch
        %423 = sbr.rel (%p420) target = $region64
      $region63: #{tpu_custom_call.1} parent=5 // pred_region
        %s424 = ssub.s32 %s26, 1
        // Predicated region
        $region65: #{tpu_custom_call.1} parent=63 // pred_check
          %p425 = pneg %p47
        $region66: #{tpu_custom_call.1} parent=63 // pred_check_branch
          %427 = sbr.rel (%p425) target = $region68
        $region67: #{tpu_custom_call.1} parent=63 // pred_region
          %428 = dma.done [#allocation3], 4096
        $region68: #{tpu_custom_call.1} parent=63 // pred_fallthru
          _
        %s429 = sand.u32 %s31, 1
        %s430 = scalar_lea.sflag [#allocation6], %s429
        %s431 = sand.u32 %s60, 1
        %s432 = smul.addr %s431, 128
        %s433 = scalar_lea.vmem [#allocation5], %s432
        // Predicated region
        $region69: #{tpu_custom_call.1} parent=63 // pred_check
          %p434 = pneg %p73
        $region70: #{tpu_custom_call.1} parent=63 // pred_check_branch
          %436 = sbr.rel (%p434) target = $region72
        $region71: #{tpu_custom_call.1} parent=63 // pred_region
          %437 = dma.done %s430, 2048
        $region72: #{tpu_custom_call.1} parent=63 // pred_fallthru
          _
        // Predicated region
        $region73: #{tpu_custom_call.1} parent=63 // pred_check
          %p438 = pneg %p94
        $region74: #{tpu_custom_call.1} parent=63 // pred_check_branch
          %440 = sbr.rel (%p438) target = $region76
        $region75: #{tpu_custom_call.1} parent=63 // pred_region
          %441 = dma.done [#allocation6], 1024
        $region76: #{tpu_custom_call.1} parent=63 // pred_fallthru
          _
        // Predicated region
        $region77: #{tpu_custom_call.1} parent=63 // pred_check
          %p442 = pneg %p136
        $region78: #{tpu_custom_call.1} parent=63 // pred_check_branch
          %444 = sbr.rel (%p442) target = $region80
        $region79: #{tpu_custom_call.1} parent=63 // pred_region
          %445 = dma.done [#allocation9], 1024
        $region80: #{tpu_custom_call.1} parent=63 // pred_fallthru
          _
        // Predicated region
        $region81: #{tpu_custom_call.1} parent=63 // pred_check
          %p446 = pneg %p178
        $region82: #{tpu_custom_call.1} parent=63 // pred_check_branch
          %448 = sbr.rel (%p446) target = $region84
        $region83: #{tpu_custom_call.1} parent=63 // pred_region
          %449 = dma.done [#allocation9], 1024
        $region84: #{tpu_custom_call.1} parent=63 // pred_fallthru
          _
        // Predicated region
        $region85: #{tpu_custom_call.1} parent=63 // pred_check
          %p450 = pneg %p220
        $region86: #{tpu_custom_call.1} parent=63 // pred_check_branch
          %452 = sbr.rel (%p450) target = $region88
        $region87: #{tpu_custom_call.1} parent=63 // pred_region
          %453 = dma.done [#allocation12], 512
        $region88: #{tpu_custom_call.1} parent=63 // pred_fallthru
          _
        // Predicated region
        $region89: #{tpu_custom_call.1} parent=63 // pred_check
          %p454 = pneg %p241
        $region90: #{tpu_custom_call.1} parent=63 // pred_check_branch
          %456 = sbr.rel (%p454) target = $region92
        $region91: #{tpu_custom_call.1} parent=63 // pred_region
          %457 = dma.done [#allocation12], 1024
        $region92: #{tpu_custom_call.1} parent=63 // pred_fallthru
          _
        %p458 = pneg %p47
        %p459 = pneg %p44
        %s460 = sand.u32 %s31, 1
        %s461 = scalar_lea.sflag [#allocation6], %s460
        %s462 = sand.u32 %s60, 1
        %s463 = smul.addr %s462, 128
        %s464 = scalar_lea.vmem [#allocation5], %s463
        %p465 = pneg %p73
        %p466 = pneg %p70
        %p467 = pneg %p94
        %p468 = pneg %p91
        %p469 = pneg %p115
        %p470 = pneg %p112
        %p471 = pneg %p136
        %p472 = pneg %p133
        %p473 = pneg %p157
        %p474 = pneg %p154
        %p475 = pneg %p178
        %p476 = pneg %p175
        %p477 = pneg %p199
        %p478 = pneg %p196
        %p479 = pneg %p220
        %p480 = pneg %p217
        %p481 = pneg %p241
        %p482 = pneg %p238
        %p483 = pneg %p262
        %p484 = pneg %p259
        %p485 = pneg %p288
        %p486 = pneg %p285
        %s487 = sand.u32 %s275, 1
        %s488 = scalar_lea.sflag [#allocation4], %s487
        %s489 = sand.u32 %s275, 1
        %s490 = smul.addr %s489, 32
        %s491 = scalar_lea.vmem [#allocation14], %s490
        %s492 = smul.u32 32, %s31
        %s493 = smul.u32 4, %s31
        %v495 = vld [vmem:[#allocation2] sm:$0xff]
        %v496 = vld [vmem:[#allocation2 + $0x8] sm:$0xff]
        %v497 = vld [vmem:[#allocation2 + $0x10] sm:$0xff]
        %v498 = vld [vmem:[#allocation2 + $0x18] sm:$0xff]
        %v499 = vld [vmem:[#allocation2 + $0x20] sm:$0xff]
        %v500 = vld [vmem:[#allocation2 + $0x28] sm:$0xff]
        %v501 = vld [vmem:[#allocation2 + $0x30] sm:$0xff]
        %v502 = vld [vmem:[#allocation2 + $0x38] sm:$0xff]
        %v503 = vld [vmem:[#allocation2 + $0x40] sm:$0xff]
        %v504 = vld [vmem:[#allocation2 + $0x48] sm:$0xff]
        %v505 = vld [vmem:[#allocation2 + $0x50] sm:$0xff]
        %v506 = vld [vmem:[#allocation2 + $0x58] sm:$0xff]
        %v507 = vld [vmem:[#allocation2 + $0x60] sm:$0xff]
        %v508 = vld [vmem:[#allocation2 + $0x68] sm:$0xff]
        %v509 = vld [vmem:[#allocation2 + $0x70] sm:$0xff]
        %v510 = vld [vmem:[#allocation2 + $0x78] sm:$0xff]
        %v511 = vld [vmem:[#allocation2 + $0x80] sm:$0xff]
        %v512 = vld [vmem:[#allocation2 + $0x88] sm:$0xff]
        %v513 = vld [vmem:[#allocation2 + $0x90] sm:$0xff]
        %v514 = vld [vmem:[#allocation2 + $0x98] sm:$0xff]
        %v515 = vld [vmem:[#allocation2 + $0xa0] sm:$0xff]
        %v516 = vld [vmem:[#allocation2 + $0xa8] sm:$0xff]
        %v517 = vld [vmem:[#allocation2 + $0xb0] sm:$0xff]
        %v518 = vld [vmem:[#allocation2 + $0xb8] sm:$0xff]
        %v519 = vld [vmem:[#allocation2 + $0xc0] sm:$0xff]
        %v520 = vld [vmem:[#allocation2 + $0xc8] sm:$0xff]
        %v521 = vld [vmem:[#allocation2 + $0xd0] sm:$0xff]
        %v522 = vld [vmem:[#allocation2 + $0xd8] sm:$0xff]
        %v523 = vld [vmem:[#allocation2 + $0xe0] sm:$0xff]
        %v524 = vld [vmem:[#allocation2 + $0xe8] sm:$0xff]
        %v525 = vld [vmem:[#allocation2 + $0xf0] sm:$0xff]
        %v526 = vld [vmem:[#allocation2 + $0xf8] sm:$0xff]
        %v527 = vld [vmem:[%s433] sm:$0xf]
        %v528 = vld [vmem:[%s433 + $0x4] sm:$0xf]
        %v529 = vld [vmem:[%s433 + $0x8] sm:$0xf]
        %v530 = vld [vmem:[%s433 + $0xc] sm:$0xf]
        %v531 = vld [vmem:[%s433 + $0x10] sm:$0xf]
        %v532 = vld [vmem:[%s433 + $0x14] sm:$0xf]
        %v533 = vld [vmem:[%s433 + $0x18] sm:$0xf]
        %v534 = vld [vmem:[%s433 + $0x1c] sm:$0xf]
        %v535 = vld [vmem:[%s433 + $0x20] sm:$0xf]
        %v536 = vld [vmem:[%s433 + $0x24] sm:$0xf]
        %v537 = vld [vmem:[%s433 + $0x28] sm:$0xf]
        %v538 = vld [vmem:[%s433 + $0x2c] sm:$0xf]
        %v539 = vld [vmem:[%s433 + $0x30] sm:$0xf]
        %v540 = vld [vmem:[%s433 + $0x34] sm:$0xf]
        %v541 = vld [vmem:[%s433 + $0x38] sm:$0xf]
        %v542 = vld [vmem:[%s433 + $0x3c] sm:$0xf]
        %v543 = vld [vmem:[%s433 + $0x40] sm:$0xf]
        %v544 = vld [vmem:[%s433 + $0x44] sm:$0xf]
        %v545 = vld [vmem:[%s433 + $0x48] sm:$0xf]
        %v546 = vld [vmem:[%s433 + $0x4c] sm:$0xf]
        %v547 = vld [vmem:[%s433 + $0x50] sm:$0xf]
        %v548 = vld [vmem:[%s433 + $0x54] sm:$0xf]
        %v549 = vld [vmem:[%s433 + $0x58] sm:$0xf]
        %v550 = vld [vmem:[%s433 + $0x5c] sm:$0xf]
        %v551 = vld [vmem:[%s433 + $0x60] sm:$0xf]
        %v552 = vld [vmem:[%s433 + $0x64] sm:$0xf]
        %v553 = vld [vmem:[%s433 + $0x68] sm:$0xf]
        %v554 = vld [vmem:[%s433 + $0x6c] sm:$0xf]
        %v555 = vld [vmem:[%s433 + $0x70] sm:$0xf]
        %v556 = vld [vmem:[%s433 + $0x74] sm:$0xf]
        %v557 = vld [vmem:[%s433 + $0x78] sm:$0xf]
        %v558 = vld [vmem:[%s433 + $0x7c] sm:$0xf]
        %v559 = vld [vmem:[#allocation7] sm:$0xf]
        %v560 = vld [vmem:[#allocation7 + $0x4] sm:$0xf]
        %v561 = vld [vmem:[#allocation7 + $0x8] sm:$0xf]
        %v562 = vld [vmem:[#allocation7 + $0xc] sm:$0xf]
        %v563 = vld [vmem:[#allocation7 + $0x10] sm:$0xf]
        %v564 = vld [vmem:[#allocation7 + $0x14] sm:$0xf]
        %v565 = vld [vmem:[#allocation7 + $0x18] sm:$0xf]
        %v566 = vld [vmem:[#allocation7 + $0x1c] sm:$0xf]
        %v567 = vld [vmem:[#allocation7 + $0x20] sm:$0xf]
        %v568 = vld [vmem:[#allocation7 + $0x24] sm:$0xf]
        %v569 = vld [vmem:[#allocation7 + $0x28] sm:$0xf]
        %v570 = vld [vmem:[#allocation7 + $0x2c] sm:$0xf]
        %v571 = vld [vmem:[#allocation7 + $0x30] sm:$0xf]
        %v572 = vld [vmem:[#allocation7 + $0x34] sm:$0xf]
        %v573 = vld [vmem:[#allocation7 + $0x38] sm:$0xf]
        %v574 = vld [vmem:[#allocation7 + $0x3c] sm:$0xf]
        %v607 = vunpack.c.l.b16 %v527
        %v608 = vunpack.c.l.b16 %v528
        %v609 = vunpack.c.l.b16 %v529
        %v610 = vunpack.c.l.b16 %v530
        %v611 = vunpack.c.l.b16 %v531
        %v612 = vunpack.c.l.b16 %v532
        %v613 = vunpack.c.l.b16 %v533
        %v614 = vunpack.c.l.b16 %v534
        %v615 = vunpack.c.l.b16 %v535
        %v616 = vunpack.c.l.b16 %v536
        %v617 = vunpack.c.l.b16 %v537
        %v618 = vunpack.c.l.b16 %v538
        %v619 = vunpack.c.l.b16 %v539
        %v620 = vunpack.c.l.b16 %v540
        %v621 = vunpack.c.l.b16 %v541
        %v622 = vunpack.c.l.b16 %v542
        %v623 = vunpack.c.l.b16 %v543
        %v624 = vunpack.c.l.b16 %v544
        %v625 = vunpack.c.l.b16 %v545
        %v626 = vunpack.c.l.b16 %v546
        %v627 = vunpack.c.l.b16 %v547
        %v628 = vunpack.c.l.b16 %v548
        %v629 = vunpack.c.l.b16 %v549
        %v630 = vunpack.c.l.b16 %v550
        %v631 = vunpack.c.l.b16 %v551
        %v632 = vunpack.c.l.b16 %v552
        %v633 = vunpack.c.l.b16 %v553
        %v634 = vunpack.c.l.b16 %v554
        %v635 = vunpack.c.l.b16 %v555
        %v636 = vunpack.c.l.b16 %v556
        %v637 = vunpack.c.l.b16 %v557
        %v638 = vunpack.c.l.b16 %v558
        %v639 = vpack.c.b16 %v608, %v607
        %v640 = vpack.c.b16 %v610, %v609
        %v641 = vpack.c.b16 %v612, %v611
        %v642 = vpack.c.b16 %v614, %v613
        %v643 = vpack.c.b16 %v616, %v615
        %v644 = vpack.c.b16 %v618, %v617
        %v645 = vpack.c.b16 %v620, %v619
        %v646 = vpack.c.b16 %v622, %v621
        %v647 = vpack.c.b16 %v624, %v623
        %v648 = vpack.c.b16 %v626, %v625
        %v649 = vpack.c.b16 %v628, %v627
        %v650 = vpack.c.b16 %v630, %v629
        %v651 = vpack.c.b16 %v632, %v631
        %v652 = vpack.c.b16 %v634, %v633
        %v653 = vpack.c.b16 %v636, %v635
        %v654 = vpack.c.b16 %v638, %v637
        %v687 = vunpack.c.l.b16 %v559
        %v688 = vunpack.c.l.b16 %v560
        %v689 = vunpack.c.l.b16 %v561
        %v690 = vunpack.c.l.b16 %v562
        %v691 = vunpack.c.l.b16 %v563
        %v692 = vunpack.c.l.b16 %v564
        %v693 = vunpack.c.l.b16 %v565
        %v694 = vunpack.c.l.b16 %v566
        %v695 = vunpack.c.l.b16 %v567
        %v696 = vunpack.c.l.b16 %v568
        %v697 = vunpack.c.l.b16 %v569
        %v698 = vunpack.c.l.b16 %v570
        %v699 = vunpack.c.l.b16 %v571
        %v700 = vunpack.c.l.b16 %v572
        %v701 = vunpack.c.l.b16 %v573
        %v702 = vunpack.c.l.b16 %v574
        %v703 = vpack.c.b16 %v688, %v687
        %v704 = vpack.c.b16 %v690, %v689
        %v705 = vpack.c.b16 %v692, %v691
        %v706 = vpack.c.b16 %v694, %v693
        %v707 = vpack.c.b16 %v696, %v695
        %v708 = vpack.c.b16 %v698, %v697
        %v709 = vpack.c.b16 %v700, %v699
        %v710 = vpack.c.b16 %v702, %v701
        %719 = vmatprep.subr.bf16.mxu0 0
        %720 = vmatpush1.bf16.msra.mxu0 %v703
        %721 = vmatprep.subr.bf16.mxu0 0
        %722 = vmatpush1.bf16.msra.mxu0 %v704
        %723 = vmatprep.subr.bf16.mxu0 0
        %724 = vmatpush1.bf16.msra.mxu0 %v705
        %725 = vmatprep.subr.bf16.mxu0 0
        %726 = vmatpush1.bf16.msra.mxu0 %v706
        %727 = vmatprep.subr.bf16.mxu0 0
        %728 = vmatpush1.bf16.msra.mxu0 %v707
        %729 = vmatprep.subr.bf16.mxu0 0
        %730 = vmatpush1.bf16.msra.mxu0 %v708
        %731 = vmatprep.subr.bf16.mxu0 0
        %732 = vmatpush1.bf16.msra.mxu0 %v709
        %733 = vmatprep.subr.bf16.mxu0 0
        %734 = vmatpush1.bf16.msra.mxu0 %v710
        %735 = vmatprep.subr.bf16.mxu0 0
        %736 = vmatpush1.bf16.msra.mxu0 0
        %737 = vmatprep.subr.bf16.mxu0 0
        %738 = vmatpush1.bf16.msra.mxu0 0
        %739 = vmatprep.subr.bf16.mxu0 0
        %740 = vmatpush1.bf16.msra.mxu0 0
        %741 = vmatprep.subr.bf16.mxu0 0
        %742 = vmatpush1.bf16.msra.mxu0 0
        %743 = vmatprep.subr.bf16.mxu0 0
        %744 = vmatpush1.bf16.msra.mxu0 0
        %745 = vmatprep.subr.bf16.mxu0 0
        %746 = vmatpush1.bf16.msra.mxu0 0
        %747 = vmatprep.subr.bf16.mxu0 0
        %748 = vmatpush1.bf16.msra.mxu0 0
        %749 = vmatprep.subr.bf16.mxu0 0
        %750 = vmatpush1.bf16.msra.mxu0 0
        %751 = vmatprep.mubr.bf16.mxu0 0
        %752 = vmatmul.mubr.bf16.gmra.mrb[0].mxu0 %v639
        %v753 = vpop.f32.mrb[0].mxu0
        %v754 = vadd.f32 0.0, %v753
        %v755 = vpop.f32.mrb[0].mxu0
        %v756 = vpop.f32.mrb[0].mxu0
        %v757 = vadd.f32 0.0, %v756
        %v758 = vpop.f32.mrb[0].mxu0
        %759 = vmatprep.mubr.bf16.mxu0 0
        %760 = vmatmul.mubr.bf16.gmra.mrb[0].mxu0 %v640
        %v761 = vpop.f32.mrb[0].mxu0
        %v762 = vadd.f32 0.0, %v761
        %v763 = vpop.f32.mrb[0].mxu0
        %v764 = vpop.f32.mrb[0].mxu0
        %v765 = vadd.f32 0.0, %v764
        %v766 = vpop.f32.mrb[0].mxu0
        %767 = vmatprep.mubr.bf16.mxu0 0
        %768 = vmatmul.mubr.bf16.gmra.mrb[0].mxu0 %v641
        %v769 = vpop.f32.mrb[0].mxu0
        %v770 = vadd.f32 0.0, %v769
        %v771 = vpop.f32.mrb[0].mxu0
        %v772 = vpop.f32.mrb[0].mxu0
        %v773 = vadd.f32 0.0, %v772
        %v774 = vpop.f32.mrb[0].mxu0
        %775 = vmatprep.mubr.bf16.mxu0 0
        %776 = vmatmul.mubr.bf16.gmra.mrb[0].mxu0 %v642
        %v777 = vpop.f32.mrb[0].mxu0
        %v778 = vadd.f32 0.0, %v777
        %v779 = vpop.f32.mrb[0].mxu0
        %v780 = vpop.f32.mrb[0].mxu0
        %v781 = vadd.f32 0.0, %v780
        %v782 = vpop.f32.mrb[0].mxu0
        %783 = vmatprep.mubr.bf16.mxu0 0
        %784 = vmatmul.mubr.bf16.gmra.mrb[0].mxu0 %v643
        %v785 = vpop.f32.mrb[0].mxu0
        %v786 = vadd.f32 0.0, %v785
        %v787 = vpop.f32.mrb[0].mxu0
        %v788 = vpop.f32.mrb[0].mxu0
        %v789 = vadd.f32 0.0, %v788
        %v790 = vpop.f32.mrb[0].mxu0
        %791 = vmatprep.mubr.bf16.mxu0 0
        %792 = vmatmul.mubr.bf16.gmra.mrb[0].mxu0 %v644
        %v793 = vpop.f32.mrb[0].mxu0
        %v794 = vadd.f32 0.0, %v793
        %v795 = vpop.f32.mrb[0].mxu0
        %v796 = vpop.f32.mrb[0].mxu0
        %v797 = vadd.f32 0.0, %v796
        %v798 = vpop.f32.mrb[0].mxu0
        %799 = vmatprep.mubr.bf16.mxu0 0
        %800 = vmatmul.mubr.bf16.gmra.mrb[0].mxu0 %v645
        %v801 = vpop.f32.mrb[0].mxu0
        %v802 = vadd.f32 0.0, %v801
        %v803 = vpop.f32.mrb[0].mxu0
        %v804 = vpop.f32.mrb[0].mxu0
        %v805 = vadd.f32 0.0, %v804
        %v806 = vpop.f32.mrb[0].mxu0
        %807 = vmatprep.mubr.bf16.mxu0 0
        %808 = vmatmul.mubr.bf16.gmra.mrb[0].mxu0 %v646
        %v809 = vpop.f32.mrb[0].mxu0
        %v810 = vadd.f32 0.0, %v809
        %v811 = vpop.f32.mrb[0].mxu0
        %v812 = vpop.f32.mrb[0].mxu0
        %v813 = vadd.f32 0.0, %v812
        %v814 = vpop.f32.mrb[0].mxu0
        %815 = vmatprep.mubr.bf16.mxu0 0
        %816 = vmatmul.mubr.bf16.gmra.mrb[0].mxu0 %v647
        %v817 = vpop.f32.mrb[0].mxu0
        %v818 = vadd.f32 0.0, %v817
        %v819 = vpop.f32.mrb[0].mxu0
        %v820 = vpop.f32.mrb[0].mxu0
        %v821 = vadd.f32 0.0, %v820
        %v822 = vpop.f32.mrb[0].mxu0
        %823 = vmatprep.mubr.bf16.mxu0 0
        %824 = vmatmul.mubr.bf16.gmra.mrb[0].mxu0 %v648
        %v825 = vpop.f32.mrb[0].mxu0
        %v826 = vadd.f32 0.0, %v825
        %v827 = vpop.f32.mrb[0].mxu0
        %v828 = vpop.f32.mrb[0].mxu0
        %v829 = vadd.f32 0.0, %v828
        %v830 = vpop.f32.mrb[0].mxu0
        %831 = vmatprep.mubr.bf16.mxu0 0
        %832 = vmatmul.mubr.bf16.gmra.mrb[0].mxu0 %v649
        %v833 = vpop.f32.mrb[0].mxu0
        %v834 = vadd.f32 0.0, %v833
        %v835 = vpop.f32.mrb[0].mxu0
        %v836 = vpop.f32.mrb[0].mxu0
        %v837 = vadd.f32 0.0, %v836
        %v838 = vpop.f32.mrb[0].mxu0
        %839 = vmatprep.mubr.bf16.mxu0 0
        %840 = vmatmul.mubr.bf16.gmra.mrb[0].mxu0 %v650
        %v841 = vpop.f32.mrb[0].mxu0
        %v842 = vadd.f32 0.0, %v841
        %v843 = vpop.f32.mrb[0].mxu0
        %v844 = vpop.f32.mrb[0].mxu0
        %v845 = vadd.f32 0.0, %v844
        %v846 = vpop.f32.mrb[0].mxu0
        %847 = vmatprep.mubr.bf16.mxu0 0
        %848 = vmatmul.mubr.bf16.gmra.mrb[0].mxu0 %v651
        %v849 = vpop.f32.mrb[0].mxu0
        %v850 = vadd.f32 0.0, %v849
        %v851 = vpop.f32.mrb[0].mxu0
        %v852 = vpop.f32.mrb[0].mxu0
        %v853 = vadd.f32 0.0, %v852
        %v854 = vpop.f32.mrb[0].mxu0
        %855 = vmatprep.mubr.bf16.mxu0 0
        %856 = vmatmul.mubr.bf16.gmra.mrb[0].mxu0 %v652
        %v857 = vpop.f32.mrb[0].mxu0
        %v858 = vadd.f32 0.0, %v857
        %v859 = vpop.f32.mrb[0].mxu0
        %v860 = vpop.f32.mrb[0].mxu0
        %v861 = vadd.f32 0.0, %v860
        %v862 = vpop.f32.mrb[0].mxu0
        %863 = vmatprep.mubr.bf16.mxu0 0
        %864 = vmatmul.mubr.bf16.gmra.mrb[0].mxu0 %v653
        %v865 = vpop.f32.mrb[0].mxu0
        %v866 = vadd.f32 0.0, %v865
        %v867 = vpop.f32.mrb[0].mxu0
        %v868 = vpop.f32.mrb[0].mxu0
        %v869 = vadd.f32 0.0, %v868
        %v870 = vpop.f32.mrb[0].mxu0
        %871 = vmatprep.mubr.bf16.mxu0 0
        %872 = vmatmul.mubr.bf16.gmra.mrb[0].mxu0 %v654
        %v873 = vpop.f32.mrb[0].mxu0
        %v874 = vadd.f32 0.0, %v873
        %v875 = vpop.f32.mrb[0].mxu0
        %v876 = vpop.f32.mrb[0].mxu0
        %v877 = vadd.f32 0.0, %v876
        %v878 = vpop.f32.mrb[0].mxu0
        %879 = vdwg.mxu0
        %v880 = vpack.c.bf16 %v757, %v754
        %v881 = vpack.c.bf16 %v765, %v762
        %v882 = vpack.c.bf16 %v773, %v770
        %v883 = vpack.c.bf16 %v781, %v778
        %v884 = vpack.c.bf16 %v789, %v786
        %v885 = vpack.c.bf16 %v797, %v794
        %v886 = vpack.c.bf16 %v805, %v802
        %v887 = vpack.c.bf16 %v813, %v810
        %v888 = vpack.c.bf16 %v821, %v818
        %v889 = vpack.c.bf16 %v829, %v826
        %v890 = vpack.c.bf16 %v837, %v834
        %v891 = vpack.c.bf16 %v845, %v842
        %v892 = vpack.c.bf16 %v853, %v850
        %v893 = vpack.c.bf16 %v861, %v858
        %v894 = vpack.c.bf16 %v869, %v866
        %v895 = vpack.c.bf16 %v877, %v874
        %v896 = vld [vmem:[%s3] sm:$0x1]
        %v898 = vlaneseq
        %v899 = vshrl.u32 %v898, 7
        %v900 = vsub.s32 0, %v899
        %v901 = vrot.slane %v896, %v900
        %v935 = vunpack.c.l.b16 %v495
        %v936 = vunpack.c.h.b16 %v495
        %v937 = vunpack.c.l.b16 %v496
        %v938 = vunpack.c.h.b16 %v496
        %v939 = vunpack.c.l.b16 %v497
        %v940 = vunpack.c.h.b16 %v497
        %v941 = vunpack.c.l.b16 %v498
        %v942 = vunpack.c.h.b16 %v498
        %v943 = vunpack.c.l.b16 %v499
        %v944 = vunpack.c.h.b16 %v499
        %v945 = vunpack.c.l.b16 %v500
        %v946 = vunpack.c.h.b16 %v500
        %v947 = vunpack.c.l.b16 %v501
        %v948 = vunpack.c.h.b16 %v501
        %v949 = vunpack.c.l.b16 %v502
        %v950 = vunpack.c.h.b16 %v502
        %v951 = vunpack.c.l.b16 %v503
        %v952 = vunpack.c.h.b16 %v503
        %v953 = vunpack.c.l.b16 %v504
        %v954 = vunpack.c.h.b16 %v504
        %v955 = vunpack.c.l.b16 %v505
        %v956 = vunpack.c.h.b16 %v505
        %v957 = vunpack.c.l.b16 %v506
        %v958 = vunpack.c.h.b16 %v506
        %v959 = vunpack.c.l.b16 %v507
        %v960 = vunpack.c.h.b16 %v507
        %v961 = vunpack.c.l.b16 %v508
        %v962 = vunpack.c.h.b16 %v508
        %v963 = vunpack.c.l.b16 %v509
        %v964 = vunpack.c.h.b16 %v509
        %v965 = vunpack.c.l.b16 %v510
        %v966 = vunpack.c.h.b16 %v510
        %v967 = vunpack.c.l.b16 %v511
        %v968 = vunpack.c.h.b16 %v511
        %v969 = vunpack.c.l.b16 %v512
        %v970 = vunpack.c.h.b16 %v512
        %v971 = vunpack.c.l.b16 %v513
        %v972 = vunpack.c.h.b16 %v513
        %v973 = vunpack.c.l.b16 %v514
        %v974 = vunpack.c.h.b16 %v514
        %v975 = vunpack.c.l.b16 %v515
        %v976 = vunpack.c.h.b16 %v515
        %v977 = vunpack.c.l.b16 %v516
        %v978 = vunpack.c.h.b16 %v516
        %v979 = vunpack.c.l.b16 %v517
        %v980 = vunpack.c.h.b16 %v517
        %v981 = vunpack.c.l.b16 %v518
        %v982 = vunpack.c.h.b16 %v518
        %v983 = vunpack.c.l.b16 %v519
        %v984 = vunpack.c.h.b16 %v519
        %v985 = vunpack.c.l.b16 %v520
        %v986 = vunpack.c.h.b16 %v520
        %v987 = vunpack.c.l.b16 %v521
        %v988 = vunpack.c.h.b16 %v521
        %v989 = vunpack.c.l.b16 %v522
        %v990 = vunpack.c.h.b16 %v522
        %v991 = vunpack.c.l.b16 %v523
        %v992 = vunpack.c.h.b16 %v523
        %v993 = vunpack.c.l.b16 %v524
        %v994 = vunpack.c.h.b16 %v524
        %v995 = vunpack.c.l.b16 %v525
        %v996 = vunpack.c.h.b16 %v525
        %v997 = vunpack.c.l.b16 %v526
        %v998 = vunpack.c.h.b16 %v526
        %v999 = vpack.c.b16 %v937, %v935
        %v1000 = vpack.c.b16 %v938, %v936
        %v1001 = vpack.c.b16 %v941, %v939
        %v1002 = vpack.c.b16 %v942, %v940
        %v1003 = vpack.c.b16 %v945, %v943
        %v1004 = vpack.c.b16 %v946, %v944
        %v1005 = vpack.c.b16 %v949, %v947
        %v1006 = vpack.c.b16 %v950, %v948
        %v1007 = vpack.c.b16 %v953, %v951
        %v1008 = vpack.c.b16 %v954, %v952
        %v1009 = vpack.c.b16 %v957, %v955
        %v1010 = vpack.c.b16 %v958, %v956
        %v1011 = vpack.c.b16 %v961, %v959
        %v1012 = vpack.c.b16 %v962, %v960
        %v1013 = vpack.c.b16 %v965, %v963
        %v1014 = vpack.c.b16 %v966, %v964
        %v1015 = vpack.c.b16 %v969, %v967
        %v1016 = vpack.c.b16 %v970, %v968
        %v1017 = vpack.c.b16 %v973, %v971
        %v1018 = vpack.c.b16 %v974, %v972
        %v1019 = vpack.c.b16 %v977, %v975
        %v1020 = vpack.c.b16 %v978, %v976
        %v1021 = vpack.c.b16 %v981, %v979
        %v1022 = vpack.c.b16 %v982, %v980
        %v1023 = vpack.c.b16 %v985, %v983
        %v1024 = vpack.c.b16 %v986, %v984
        %v1025 = vpack.c.b16 %v989, %v987
        %v1026 = vpack.c.b16 %v990, %v988
        %v1027 = vpack.c.b16 %v993, %v991
        %v1028 = vpack.c.b16 %v994, %v992
        %v1029 = vpack.c.b16 %v997, %v995
        %v1030 = vpack.c.b16 %v998, %v996
        %1063 = vmatprep.subr.bf16.mxu0 0
        %1064 = vmatpush1.bf16.msra.mxu0 %v880
        %1065 = vmatprep.subr.bf16.mxu0 0
        %1066 = vmatpush1.bf16.msra.mxu0 %v881
        %1067 = vmatprep.subr.bf16.mxu0 0
        %1068 = vmatpush1.bf16.msra.mxu0 %v882
        %1069 = vmatprep.subr.bf16.mxu0 0
        %1070 = vmatpush1.bf16.msra.mxu0 %v883
        %1071 = vmatprep.subr.bf16.mxu0 0
        %1072 = vmatpush1.bf16.msra.mxu0 %v884
        %1073 = vmatprep.subr.bf16.mxu0 0
        %1074 = vmatpush1.bf16.msra.mxu0 %v885
        %1075 = vmatprep.subr.bf16.mxu0 0
        %1076 = vmatpush1.bf16.msra.mxu0 %v886
        %1077 = vmatprep.subr.bf16.mxu0 0
        %1078 = vmatpush1.bf16.msra.mxu0 %v887
        %1079 = vmatprep.subr.bf16.mxu0 0
        %1080 = vmatpush1.bf16.msra.mxu0 %v888
        %1081 = vmatprep.subr.bf16.mxu0 0
        %1082 = vmatpush1.bf16.msra.mxu0 %v889
        %1083 = vmatprep.subr.bf16.mxu0 0
        %1084 = vmatpush1.bf16.msra.mxu0 %v890
        %1085 = vmatprep.subr.bf16.mxu0 0
        %1086 = vmatpush1.bf16.msra.mxu0 %v891
        %1087 = vmatprep.subr.bf16.mxu0 0
        %1088 = vmatpush1.bf16.msra.mxu0 %v892
        %1089 = vmatprep.subr.bf16.mxu0 0
        %1090 = vmatpush1.bf16.msra.mxu0 %v893
        %1091 = vmatprep.subr.bf16.mxu0 0
        %1092 = vmatpush1.bf16.msra.mxu0 %v894
        %1093 = vmatprep.subr.bf16.mxu0 0
        %1094 = vmatpush1.bf16.msra.mxu0 %v895
        %1095 = vmatprep.mubr.bf16.mxu0 %v1000
        %1096 = vmatmul.mubr.bf16.gmra.mrb[0].mxu0 %v999
        %v1097 = vpop.f32.mrb[0].mxu0
        %v1098 = vadd.f32 %v901, %v1097
        %v1099 = vpop.f32.mrb[0].mxu0
        %v1100 = vpop.f32.mrb[0].mxu0
        %v1101 = vadd.f32 %v901, %v1100
        %v1102 = vpop.f32.mrb[0].mxu0
        %1103 = vmatprep.mubr.bf16.mxu0 %v1002
        %1104 = vmatmul.mubr.bf16.gmra.mrb[0].mxu0 %v1001
        %v1105 = vpop.f32.mrb[0].mxu0
        %v1106 = vadd.f32 %v901, %v1105
        %v1107 = vpop.f32.mrb[0].mxu0
        %v1108 = vpop.f32.mrb[0].mxu0
        %v1109 = vadd.f32 %v901, %v1108
        %v1110 = vpop.f32.mrb[0].mxu0
        %1111 = vmatprep.mubr.bf16.mxu0 %v1004
        %1112 = vmatmul.mubr.bf16.gmra.mrb[0].mxu0 %v1003
        %v1113 = vpop.f32.mrb[0].mxu0
        %v1114 = vadd.f32 %v901, %v1113
        %v1115 = vpop.f32.mrb[0].mxu0
        %v1116 = vpop.f32.mrb[0].mxu0
        %v1117 = vadd.f32 %v901, %v1116
        %v1118 = vpop.f32.mrb[0].mxu0
        %1119 = vmatprep.mubr.bf16.mxu0 %v1006
        %1120 = vmatmul.mubr.bf16.gmra.mrb[0].mxu0 %v1005
        %v1121 = vpop.f32.mrb[0].mxu0
        %v1122 = vadd.f32 %v901, %v1121
        %v1123 = vpop.f32.mrb[0].mxu0
        %v1124 = vpop.f32.mrb[0].mxu0
        %v1125 = vadd.f32 %v901, %v1124
        %v1126 = vpop.f32.mrb[0].mxu0
        %1127 = vmatprep.mubr.bf16.mxu0 %v1008
        %1128 = vmatmul.mubr.bf16.gmra.mrb[0].mxu0 %v1007
        %v1129 = vpop.f32.mrb[0].mxu0
        %v1130 = vadd.f32 %v901, %v1129
        %v1131 = vpop.f32.mrb[0].mxu0
        %v1132 = vpop.f32.mrb[0].mxu0
        %v1133 = vadd.f32 %v901, %v1132
        %v1134 = vpop.f32.mrb[0].mxu0
        %1135 = vmatprep.mubr.bf16.mxu0 %v1010
        %1136 = vmatmul.mubr.bf16.gmra.mrb[0].mxu0 %v1009
        %v1137 = vpop.f32.mrb[0].mxu0
        %v1138 = vadd.f32 %v901, %v1137
        %v1139 = vpop.f32.mrb[0].mxu0
        %v1140 = vpop.f32.mrb[0].mxu0
        %v1141 = vadd.f32 %v901, %v1140
        %v1142 = vpop.f32.mrb[0].mxu0
        %1143 = vmatprep.mubr.bf16.mxu0 %v1012
        %1144 = vmatmul.mubr.bf16.gmra.mrb[0].mxu0 %v1011
        %v1145 = vpop.f32.mrb[0].mxu0
        %v1146 = vadd.f32 %v901, %v1145
        %v1147 = vpop.f32.mrb[0].mxu0
        %v1148 = vpop.f32.mrb[0].mxu0
        %v1149 = vadd.f32 %v901, %v1148
        %v1150 = vpop.f32.mrb[0].mxu0
        %1151 = vmatprep.mubr.bf16.mxu0 %v1014
        %1152 = vmatmul.mubr.bf16.gmra.mrb[0].mxu0 %v1013
        %v1153 = vpop.f32.mrb[0].mxu0
        %v1154 = vadd.f32 %v901, %v1153
        %v1155 = vpop.f32.mrb[0].mxu0
        %v1156 = vpop.f32.mrb[0].mxu0
        %v1157 = vadd.f32 %v901, %v1156
        %v1158 = vpop.f32.mrb[0].mxu0
        %1159 = vmatprep.mubr.bf16.mxu0 %v1016
        %1160 = vmatmul.mubr.bf16.gmra.mrb[0].mxu0 %v1015
        %v1161 = vpop.f32.mrb[0].mxu0
        %v1162 = vadd.f32 %v901, %v1161
        %v1163 = vpop.f32.mrb[0].mxu0
        %v1164 = vpop.f32.mrb[0].mxu0
        %v1165 = vadd.f32 %v901, %v1164
        %v1166 = vpop.f32.mrb[0].mxu0
        %1167 = vmatprep.mubr.bf16.mxu0 %v1018
        %1168 = vmatmul.mubr.bf16.gmra.mrb[0].mxu0 %v1017
        %v1169 = vpop.f32.mrb[0].mxu0
        %v1170 = vadd.f32 %v901, %v1169
        %v1171 = vpop.f32.mrb[0].mxu0
        %v1172 = vpop.f32.mrb[0].mxu0
        %v1173 = vadd.f32 %v901, %v1172
        %v1174 = vpop.f32.mrb[0].mxu0
        %1175 = vmatprep.mubr.bf16.mxu0 %v1020
        %1176 = vmatmul.mubr.bf16.gmra.mrb[0].mxu0 %v1019
        %v1177 = vpop.f32.mrb[0].mxu0
        %v1178 = vadd.f32 %v901, %v1177
        %v1179 = vpop.f32.mrb[0].mxu0
        %v1180 = vpop.f32.mrb[0].mxu0
        %v1181 = vadd.f32 %v901, %v1180
        %v1182 = vpop.f32.mrb[0].mxu0
        %1183 = vmatprep.mubr.bf16.mxu0 %v1022
        %1184 = vmatmul.mubr.bf16.gmra.mrb[0].mxu0 %v1021
        %v1185 = vpop.f32.mrb[0].mxu0
        %v1186 = vadd.f32 %v901, %v1185
        %v1187 = vpop.f32.mrb[0].mxu0
        %v1188 = vpop.f32.mrb[0].mxu0
        %v1189 = vadd.f32 %v901, %v1188
        %v1190 = vpop.f32.mrb[0].mxu0
        %1191 = vmatprep.mubr.bf16.mxu0 %v1024
        %1192 = vmatmul.mubr.bf16.gmra.mrb[0].mxu0 %v1023
        %v1193 = vpop.f32.mrb[0].mxu0
        %v1194 = vadd.f32 %v901, %v1193
        %v1195 = vpop.f32.mrb[0].mxu0
        %v1196 = vpop.f32.mrb[0].mxu0
        %v1197 = vadd.f32 %v901, %v1196
        %v1198 = vpop.f32.mrb[0].mxu0
        %1199 = vmatprep.mubr.bf16.mxu0 %v1026
        %1200 = vmatmul.mubr.bf16.gmra.mrb[0].mxu0 %v1025
        %v1201 = vpop.f32.mrb[0].mxu0
        %v1202 = vadd.f32 %v901, %v1201
        %v1203 = vpop.f32.mrb[0].mxu0
        %v1204 = vpop.f32.mrb[0].mxu0
        %v1205 = vadd.f32 %v901, %v1204
        %v1206 = vpop.f32.mrb[0].mxu0
        %1207 = vmatprep.mubr.bf16.mxu0 %v1028
        %1208 = vmatmul.mubr.bf16.gmra.mrb[0].mxu0 %v1027
        %v1209 = vpop.f32.mrb[0].mxu0
        %v1210 = vadd.f32 %v901, %v1209
        %v1211 = vpop.f32.mrb[0].mxu0
        %v1212 = vpop.f32.mrb[0].mxu0
        %v1213 = vadd.f32 %v901, %v1212
        %v1214 = vpop.f32.mrb[0].mxu0
        %1215 = vmatprep.mubr.bf16.mxu0 %v1030
        %1216 = vmatmul.mubr.bf16.gmra.mrb[0].mxu0 %v1029
        %v1217 = vpop.f32.mrb[0].mxu0
        %v1218 = vadd.f32 %v901, %v1217
        %v1219 = vpop.f32.mrb[0].mxu0
        %v1220 = vpop.f32.mrb[0].mxu0
        %v1221 = vadd.f32 %v901, %v1220
        %v1222 = vpop.f32.mrb[0].mxu0
        %1223 = vdwg.mxu0
        %v1224 = vmax.f32 %v1098, 0.0
        %v1225 = vmax.f32 %v1101, 0.0
        %v1226 = vmax.f32 %v1106, 0.0
        %v1227 = vmax.f32 %v1109, 0.0
        %v1228 = vmax.f32 %v1114, 0.0
        %v1229 = vmax.f32 %v1117, 0.0
        %v1230 = vmax.f32 %v1122, 0.0
        %v1231 = vmax.f32 %v1125, 0.0
        %v1232 = vmax.f32 %v1130, 0.0
        %v1233 = vmax.f32 %v1133, 0.0
        %v1234 = vmax.f32 %v1138, 0.0
        %v1235 = vmax.f32 %v1141, 0.0
        %v1236 = vmax.f32 %v1146, 0.0
        %v1237 = vmax.f32 %v1149, 0.0
        %v1238 = vmax.f32 %v1154, 0.0
        %v1239 = vmax.f32 %v1157, 0.0
        %v1240 = vmax.f32 %v1162, 0.0
        %v1241 = vmax.f32 %v1165, 0.0
        %v1242 = vmax.f32 %v1170, 0.0
        %v1243 = vmax.f32 %v1173, 0.0
        %v1244 = vmax.f32 %v1178, 0.0
        %v1245 = vmax.f32 %v1181, 0.0
        %v1246 = vmax.f32 %v1186, 0.0
        %v1247 = vmax.f32 %v1189, 0.0
        %v1248 = vmax.f32 %v1194, 0.0
        %v1249 = vmax.f32 %v1197, 0.0
        %v1250 = vmax.f32 %v1202, 0.0
        %v1251 = vmax.f32 %v1205, 0.0
        %v1252 = vmax.f32 %v1210, 0.0
        %v1253 = vmax.f32 %v1213, 0.0
        %v1254 = vmax.f32 %v1218, 0.0
        %v1255 = vmax.f32 %v1221, 0.0
        %v1256 = vpack.c.bf16 %v1225, %v1224
        %v1257 = vpack.c.bf16 %v1227, %v1226
        %v1258 = vpack.c.bf16 %v1229, %v1228
        %v1259 = vpack.c.bf16 %v1231, %v1230
        %v1260 = vpack.c.bf16 %v1233, %v1232
        %v1261 = vpack.c.bf16 %v1235, %v1234
        %v1262 = vpack.c.bf16 %v1237, %v1236
        %v1263 = vpack.c.bf16 %v1239, %v1238
        %v1264 = vpack.c.bf16 %v1241, %v1240
        %v1265 = vpack.c.bf16 %v1243, %v1242
        %v1266 = vpack.c.bf16 %v1245, %v1244
        %v1267 = vpack.c.bf16 %v1247, %v1246
        %v1268 = vpack.c.bf16 %v1249, %v1248
        %v1269 = vpack.c.bf16 %v1251, %v1250
        %v1270 = vpack.c.bf16 %v1253, %v1252
        %v1271 = vpack.c.bf16 %v1255, %v1254
        %v1272 = vld [vmem:[#allocation8] sm:$0xf]
        %v1273 = vld [vmem:[#allocation8 + $0x4] sm:$0xf]
        %v1274 = vld [vmem:[#allocation8 + $0x8] sm:$0xf]
        %v1275 = vld [vmem:[#allocation8 + $0xc] sm:$0xf]
        %v1276 = vld [vmem:[#allocation8 + $0x10] sm:$0xf]
        %v1277 = vld [vmem:[#allocation8 + $0x14] sm:$0xf]
        %v1278 = vld [vmem:[#allocation8 + $0x18] sm:$0xf]
        %v1279 = vld [vmem:[#allocation8 + $0x1c] sm:$0xf]
        %v1280 = vld [vmem:[#allocation8 + $0x20] sm:$0xf]
        %v1281 = vld [vmem:[#allocation8 + $0x24] sm:$0xf]
        %v1282 = vld [vmem:[#allocation8 + $0x28] sm:$0xf]
        %v1283 = vld [vmem:[#allocation8 + $0x2c] sm:$0xf]
        %v1284 = vld [vmem:[#allocation8 + $0x30] sm:$0xf]
        %v1285 = vld [vmem:[#allocation8 + $0x34] sm:$0xf]
        %v1286 = vld [vmem:[#allocation8 + $0x38] sm:$0xf]
        %v1287 = vld [vmem:[#allocation8 + $0x3c] sm:$0xf]
        %v1304 = vunpack.c.l.b16 %v1272
        %v1305 = vunpack.c.l.b16 %v1273
        %v1306 = vunpack.c.l.b16 %v1274
        %v1307 = vunpack.c.l.b16 %v1275
        %v1308 = vunpack.c.l.b16 %v1276
        %v1309 = vunpack.c.l.b16 %v1277
        %v1310 = vunpack.c.l.b16 %v1278
        %v1311 = vunpack.c.l.b16 %v1279
        %v1312 = vunpack.c.l.b16 %v1280
        %v1313 = vunpack.c.l.b16 %v1281
        %v1314 = vunpack.c.l.b16 %v1282
        %v1315 = vunpack.c.l.b16 %v1283
        %v1316 = vunpack.c.l.b16 %v1284
        %v1317 = vunpack.c.l.b16 %v1285
        %v1318 = vunpack.c.l.b16 %v1286
        %v1319 = vunpack.c.l.b16 %v1287
        %v1320 = vpack.c.b16 %v1305, %v1304
        %v1321 = vpack.c.b16 %v1307, %v1306
        %v1322 = vpack.c.b16 %v1309, %v1308
        %v1323 = vpack.c.b16 %v1311, %v1310
        %v1324 = vpack.c.b16 %v1313, %v1312
        %v1325 = vpack.c.b16 %v1315, %v1314
        %v1326 = vpack.c.b16 %v1317, %v1316
        %v1327 = vpack.c.b16 %v1319, %v1318
        %1336 = vmatprep.subr.bf16.mxu0 0
        %1337 = vmatpush1.bf16.msra.mxu0 %v1320
        %1338 = vmatprep.subr.bf16.mxu0 0
        %1339 = vmatpush1.bf16.msra.mxu0 %v1321
        %1340 = vmatprep.subr.bf16.mxu0 0
        %1341 = vmatpush1.bf16.msra.mxu0 %v1322
        %1342 = vmatprep.subr.bf16.mxu0 0
        %1343 = vmatpush1.bf16.msra.mxu0 %v1323
        %1344 = vmatprep.subr.bf16.mxu0 0
        %1345 = vmatpush1.bf16.msra.mxu0 %v1324
        %1346 = vmatprep.subr.bf16.mxu0 0
        %1347 = vmatpush1.bf16.msra.mxu0 %v1325
        %1348 = vmatprep.subr.bf16.mxu0 0
        %1349 = vmatpush1.bf16.msra.mxu0 %v1326
        %1350 = vmatprep.subr.bf16.mxu0 0
        %1351 = vmatpush1.bf16.msra.mxu0 %v1327
        %1352 = vmatprep.subr.bf16.mxu0 0
        %1353 = vmatpush1.bf16.msra.mxu0 0
        %1354 = vmatprep.subr.bf16.mxu0 0
        %1355 = vmatpush1.bf16.msra.mxu0 0
        %1356 = vmatprep.subr.bf16.mxu0 0
        %1357 = vmatpush1.bf16.msra.mxu0 0
        %1358 = vmatprep.subr.bf16.mxu0 0
        %1359 = vmatpush1.bf16.msra.mxu0 0
        %1360 = vmatprep.subr.bf16.mxu0 0
        %1361 = vmatpush1.bf16.msra.mxu0 0
        %1362 = vmatprep.subr.bf16.mxu0 0
        %1363 = vmatpush1.bf16.msra.mxu0 0
        %1364 = vmatprep.subr.bf16.mxu0 0
        %1365 = vmatpush1.bf16.msra.mxu0 0
        %1366 = vmatprep.subr.bf16.mxu0 0
        %1367 = vmatpush1.bf16.msra.mxu0 0
        %1368 = vmatprep.mubr.bf16.mxu0 0
        %1369 = vmatmul.mubr.bf16.gmra.mrb[0].mxu0 %v1256
        %v1370 = vpop.f32.mrb[0].mxu0
        %v1371 = vadd.f32 0.0, %v1370
        %v1372 = vpop.f32.mrb[0].mxu0
        %v1373 = vpop.f32.mrb[0].mxu0
        %v1374 = vadd.f32 0.0, %v1373
        %v1375 = vpop.f32.mrb[0].mxu0
        %1376 = vmatprep.mubr.bf16.mxu0 0
        %1377 = vmatmul.mubr.bf16.gmra.mrb[0].mxu0 %v1257
        %v1378 = vpop.f32.mrb[0].mxu0
        %v1379 = vadd.f32 0.0, %v1378
        %v1380 = vpop.f32.mrb[0].mxu0
        %v1381 = vpop.f32.mrb[0].mxu0
        %v1382 = vadd.f32 0.0, %v1381
        %v1383 = vpop.f32.mrb[0].mxu0
        %1384 = vmatprep.mubr.bf16.mxu0 0
        %1385 = vmatmul.mubr.bf16.gmra.mrb[0].mxu0 %v1258
        %v1386 = vpop.f32.mrb[0].mxu0
        %v1387 = vadd.f32 0.0, %v1386
        %v1388 = vpop.f32.mrb[0].mxu0
        %v1389 = vpop.f32.mrb[0].mxu0
        %v1390 = vadd.f32 0.0, %v1389
        %v1391 = vpop.f32.mrb[0].mxu0
        %1392 = vmatprep.mubr.bf16.mxu0 0
        %1393 = vmatmul.mubr.bf16.gmra.mrb[0].mxu0 %v1259
        %v1394 = vpop.f32.mrb[0].mxu0
        %v1395 = vadd.f32 0.0, %v1394
        %v1396 = vpop.f32.mrb[0].mxu0
        %v1397 = vpop.f32.mrb[0].mxu0
        %v1398 = vadd.f32 0.0, %v1397
        %v1399 = vpop.f32.mrb[0].mxu0
        %1400 = vmatprep.mubr.bf16.mxu0 0
        %1401 = vmatmul.mubr.bf16.gmra.mrb[0].mxu0 %v1260
        %v1402 = vpop.f32.mrb[0].mxu0
        %v1403 = vadd.f32 0.0, %v1402
        %v1404 = vpop.f32.mrb[0].mxu0
        %v1405 = vpop.f32.mrb[0].mxu0
        %v1406 = vadd.f32 0.0, %v1405
        %v1407 = vpop.f32.mrb[0].mxu0
        %1408 = vmatprep.mubr.bf16.mxu0 0
        %1409 = vmatmul.mubr.bf16.gmra.mrb[0].mxu0 %v1261
        %v1410 = vpop.f32.mrb[0].mxu0
        %v1411 = vadd.f32 0.0, %v1410
        %v1412 = vpop.f32.mrb[0].mxu0
        %v1413 = vpop.f32.mrb[0].mxu0
        %v1414 = vadd.f32 0.0, %v1413
        %v1415 = vpop.f32.mrb[0].mxu0
        %1416 = vmatprep.mubr.bf16.mxu0 0
        %1417 = vmatmul.mubr.bf16.gmra.mrb[0].mxu0 %v1262
        %v1418 = vpop.f32.mrb[0].mxu0
        %v1419 = vadd.f32 0.0, %v1418
        %v1420 = vpop.f32.mrb[0].mxu0
        %v1421 = vpop.f32.mrb[0].mxu0
        %v1422 = vadd.f32 0.0, %v1421
        %v1423 = vpop.f32.mrb[0].mxu0
        %1424 = vmatprep.mubr.bf16.mxu0 0
        %1425 = vmatmul.mubr.bf16.gmra.mrb[0].mxu0 %v1263
        %v1426 = vpop.f32.mrb[0].mxu0
        %v1427 = vadd.f32 0.0, %v1426
        %v1428 = vpop.f32.mrb[0].mxu0
        %v1429 = vpop.f32.mrb[0].mxu0
        %v1430 = vadd.f32 0.0, %v1429
        %v1431 = vpop.f32.mrb[0].mxu0
        %1432 = vmatprep.mubr.bf16.mxu0 0
        %1433 = vmatmul.mubr.bf16.gmra.mrb[0].mxu0 %v1264
        %v1434 = vpop.f32.mrb[0].mxu0
        %v1435 = vadd.f32 0.0, %v1434
        %v1436 = vpop.f32.mrb[0].mxu0
        %v1437 = vpop.f32.mrb[0].mxu0
        %v1438 = vadd.f32 0.0, %v1437
        %v1439 = vpop.f32.mrb[0].mxu0
        %1440 = vmatprep.mubr.bf16.mxu0 0
        %1441 = vmatmul.mubr.bf16.gmra.mrb[0].mxu0 %v1265
        %v1442 = vpop.f32.mrb[0].mxu0
        %v1443 = vadd.f32 0.0, %v1442
        %v1444 = vpop.f32.mrb[0].mxu0
        %v1445 = vpop.f32.mrb[0].mxu0
        %v1446 = vadd.f32 0.0, %v1445
        %v1447 = vpop.f32.mrb[0].mxu0
        %1448 = vmatprep.mubr.bf16.mxu0 0
        %1449 = vmatmul.mubr.bf16.gmra.mrb[0].mxu0 %v1266
        %v1450 = vpop.f32.mrb[0].mxu0
        %v1451 = vadd.f32 0.0, %v1450
        %v1452 = vpop.f32.mrb[0].mxu0
        %v1453 = vpop.f32.mrb[0].mxu0
        %v1454 = vadd.f32 0.0, %v1453
        %v1455 = vpop.f32.mrb[0].mxu0
        %1456 = vmatprep.mubr.bf16.mxu0 0
        %1457 = vmatmul.mubr.bf16.gmra.mrb[0].mxu0 %v1267
        %v1458 = vpop.f32.mrb[0].mxu0
        %v1459 = vadd.f32 0.0, %v1458
        %v1460 = vpop.f32.mrb[0].mxu0
        %v1461 = vpop.f32.mrb[0].mxu0
        %v1462 = vadd.f32 0.0, %v1461
        %v1463 = vpop.f32.mrb[0].mxu0
        %1464 = vmatprep.mubr.bf16.mxu0 0
        %1465 = vmatmul.mubr.bf16.gmra.mrb[0].mxu0 %v1268
        %v1466 = vpop.f32.mrb[0].mxu0
        %v1467 = vadd.f32 0.0, %v1466
        %v1468 = vpop.f32.mrb[0].mxu0
        %v1469 = vpop.f32.mrb[0].mxu0
        %v1470 = vadd.f32 0.0, %v1469
        %v1471 = vpop.f32.mrb[0].mxu0
        %1472 = vmatprep.mubr.bf16.mxu0 0
        %1473 = vmatmul.mubr.bf16.gmra.mrb[0].mxu0 %v1269
        %v1474 = vpop.f32.mrb[0].mxu0
        %v1475 = vadd.f32 0.0, %v1474
        %v1476 = vpop.f32.mrb[0].mxu0
        %v1477 = vpop.f32.mrb[0].mxu0
        %v1478 = vadd.f32 0.0, %v1477
        %v1479 = vpop.f32.mrb[0].mxu0
        %1480 = vmatprep.mubr.bf16.mxu0 0
        %1481 = vmatmul.mubr.bf16.gmra.mrb[0].mxu0 %v1270
        %v1482 = vpop.f32.mrb[0].mxu0
        %v1483 = vadd.f32 0.0, %v1482
        %v1484 = vpop.f32.mrb[0].mxu0
        %v1485 = vpop.f32.mrb[0].mxu0
        %v1486 = vadd.f32 0.0, %v1485
        %v1487 = vpop.f32.mrb[0].mxu0
        %1488 = vmatprep.mubr.bf16.mxu0 0
        %1489 = vmatmul.mubr.bf16.gmra.mrb[0].mxu0 %v1271
        %v1490 = vpop.f32.mrb[0].mxu0
        %v1491 = vadd.f32 0.0, %v1490
        %v1492 = vpop.f32.mrb[0].mxu0
        %v1493 = vpop.f32.mrb[0].mxu0
        %v1494 = vadd.f32 0.0, %v1493
        %v1495 = vpop.f32.mrb[0].mxu0
        %1496 = vdwg.mxu0
        %v1497 = vpack.c.bf16 %v1374, %v1371
        %v1498 = vpack.c.bf16 %v1382, %v1379
        %v1499 = vpack.c.bf16 %v1390, %v1387
        %v1500 = vpack.c.bf16 %v1398, %v1395
        %v1501 = vpack.c.bf16 %v1406, %v1403
        %v1502 = vpack.c.bf16 %v1414, %v1411
        %v1503 = vpack.c.bf16 %v1422, %v1419
        %v1504 = vpack.c.bf16 %v1430, %v1427
        %v1505 = vpack.c.bf16 %v1438, %v1435
        %v1506 = vpack.c.bf16 %v1446, %v1443
        %v1507 = vpack.c.bf16 %v1454, %v1451
        %v1508 = vpack.c.bf16 %v1462, %v1459
        %v1509 = vpack.c.bf16 %v1470, %v1467
        %v1510 = vpack.c.bf16 %v1478, %v1475
        %v1511 = vpack.c.bf16 %v1486, %v1483
        %v1512 = vpack.c.bf16 %v1494, %v1491
        %v1513 = vld [vmem:[%s5] sm:$0x1]
        %v1515 = vlaneseq
        %v1516 = vshrl.u32 %v1515, 7
        %v1517 = vsub.s32 0, %v1516
        %v1518 = vrot.slane %v1513, %v1517
        %1520 = vmatprep.subr.bf16.mxu0 0
        %1521 = vmatpush1.bf16.msra.mxu0 %v1497
        %1522 = vmatprep.subr.bf16.mxu0 0
        %1523 = vmatpush1.bf16.msra.mxu0 %v1498
        %1524 = vmatprep.subr.bf16.mxu0 0
        %1525 = vmatpush1.bf16.msra.mxu0 %v1499
        %1526 = vmatprep.subr.bf16.mxu0 0
        %1527 = vmatpush1.bf16.msra.mxu0 %v1500
        %1528 = vmatprep.subr.bf16.mxu0 0
        %1529 = vmatpush1.bf16.msra.mxu0 %v1501
        %1530 = vmatprep.subr.bf16.mxu0 0
        %1531 = vmatpush1.bf16.msra.mxu0 %v1502
        %1532 = vmatprep.subr.bf16.mxu0 0
        %1533 = vmatpush1.bf16.msra.mxu0 %v1503
        %1534 = vmatprep.subr.bf16.mxu0 0
        %1535 = vmatpush1.bf16.msra.mxu0 %v1504
        %1536 = vmatprep.subr.bf16.mxu0 0
        %1537 = vmatpush1.bf16.msra.mxu0 %v1505
        %1538 = vmatprep.subr.bf16.mxu0 0
        %1539 = vmatpush1.bf16.msra.mxu0 %v1506
        %1540 = vmatprep.subr.bf16.mxu0 0
        %1541 = vmatpush1.bf16.msra.mxu0 %v1507
        %1542 = vmatprep.subr.bf16.mxu0 0
        %1543 = vmatpush1.bf16.msra.mxu0 %v1508
        %1544 = vmatprep.subr.bf16.mxu0 0
        %1545 = vmatpush1.bf16.msra.mxu0 %v1509
        %1546 = vmatprep.subr.bf16.mxu0 0
        %1547 = vmatpush1.bf16.msra.mxu0 %v1510
        %1548 = vmatprep.subr.bf16.mxu0 0
        %1549 = vmatpush1.bf16.msra.mxu0 %v1511
        %1550 = vmatprep.subr.bf16.mxu0 0
        %1551 = vmatpush1.bf16.msra.mxu0 %v1512
        %1552 = vmatprep.mubr.bf16.mxu0 %v1000
        %1553 = vmatmul.mubr.bf16.gmra.mrb[0].mxu0 %v999
        %v1554 = vpop.f32.mrb[0].mxu0
        %v1555 = vadd.f32 %v1518, %v1554
        %v1556 = vpop.f32.mrb[0].mxu0
        %v1557 = vpop.f32.mrb[0].mxu0
        %v1558 = vadd.f32 %v1518, %v1557
        %v1559 = vpop.f32.mrb[0].mxu0
        %1560 = vmatprep.mubr.bf16.mxu0 %v1002
        %1561 = vmatmul.mubr.bf16.gmra.mrb[0].mxu0 %v1001
        %v1562 = vpop.f32.mrb[0].mxu0
        %v1563 = vadd.f32 %v1518, %v1562
        %v1564 = vpop.f32.mrb[0].mxu0
        %v1565 = vpop.f32.mrb[0].mxu0
        %v1566 = vadd.f32 %v1518, %v1565
        %v1567 = vpop.f32.mrb[0].mxu0
        %1568 = vmatprep.mubr.bf16.mxu0 %v1004
        %1569 = vmatmul.mubr.bf16.gmra.mrb[0].mxu0 %v1003
        %v1570 = vpop.f32.mrb[0].mxu0
        %v1571 = vadd.f32 %v1518, %v1570
        %v1572 = vpop.f32.mrb[0].mxu0
        %v1573 = vpop.f32.mrb[0].mxu0
        %v1574 = vadd.f32 %v1518, %v1573
        %v1575 = vpop.f32.mrb[0].mxu0
        %1576 = vmatprep.mubr.bf16.mxu0 %v1006
        %1577 = vmatmul.mubr.bf16.gmra.mrb[0].mxu0 %v1005
        %v1578 = vpop.f32.mrb[0].mxu0
        %v1579 = vadd.f32 %v1518, %v1578
        %v1580 = vpop.f32.mrb[0].mxu0
        %v1581 = vpop.f32.mrb[0].mxu0
        %v1582 = vadd.f32 %v1518, %v1581
        %v1583 = vpop.f32.mrb[0].mxu0
        %1584 = vmatprep.mubr.bf16.mxu0 %v1008
        %1585 = vmatmul.mubr.bf16.gmra.mrb[0].mxu0 %v1007
        %v1586 = vpop.f32.mrb[0].mxu0
        %v1587 = vadd.f32 %v1518, %v1586
        %v1588 = vpop.f32.mrb[0].mxu0
        %v1589 = vpop.f32.mrb[0].mxu0
        %v1590 = vadd.f32 %v1518, %v1589
        %v1591 = vpop.f32.mrb[0].mxu0
        %1592 = vmatprep.mubr.bf16.mxu0 %v1010
        %1593 = vmatmul.mubr.bf16.gmra.mrb[0].mxu0 %v1009
        %v1594 = vpop.f32.mrb[0].mxu0
        %v1595 = vadd.f32 %v1518, %v1594
        %v1596 = vpop.f32.mrb[0].mxu0
        %v1597 = vpop.f32.mrb[0].mxu0
        %v1598 = vadd.f32 %v1518, %v1597
        %v1599 = vpop.f32.mrb[0].mxu0
        %1600 = vmatprep.mubr.bf16.mxu0 %v1012
        %1601 = vmatmul.mubr.bf16.gmra.mrb[0].mxu0 %v1011
        %v1602 = vpop.f32.mrb[0].mxu0
        %v1603 = vadd.f32 %v1518, %v1602
        %v1604 = vpop.f32.mrb[0].mxu0
        %v1605 = vpop.f32.mrb[0].mxu0
        %v1606 = vadd.f32 %v1518, %v1605
        %v1607 = vpop.f32.mrb[0].mxu0
        %1608 = vmatprep.mubr.bf16.mxu0 %v1014
        %1609 = vmatmul.mubr.bf16.gmra.mrb[0].mxu0 %v1013
        %v1610 = vpop.f32.mrb[0].mxu0
        %v1611 = vadd.f32 %v1518, %v1610
        %v1612 = vpop.f32.mrb[0].mxu0
        %v1613 = vpop.f32.mrb[0].mxu0
        %v1614 = vadd.f32 %v1518, %v1613
        %v1615 = vpop.f32.mrb[0].mxu0
        %1616 = vmatprep.mubr.bf16.mxu0 %v1016
        %1617 = vmatmul.mubr.bf16.gmra.mrb[0].mxu0 %v1015
        %v1618 = vpop.f32.mrb[0].mxu0
        %v1619 = vadd.f32 %v1518, %v1618
        %v1620 = vpop.f32.mrb[0].mxu0
        %v1621 = vpop.f32.mrb[0].mxu0
        %v1622 = vadd.f32 %v1518, %v1621
        %v1623 = vpop.f32.mrb[0].mxu0
        %1624 = vmatprep.mubr.bf16.mxu0 %v1018
        %1625 = vmatmul.mubr.bf16.gmra.mrb[0].mxu0 %v1017
        %v1626 = vpop.f32.mrb[0].mxu0
        %v1627 = vadd.f32 %v1518, %v1626
        %v1628 = vpop.f32.mrb[0].mxu0
        %v1629 = vpop.f32.mrb[0].mxu0
        %v1630 = vadd.f32 %v1518, %v1629
        %v1631 = vpop.f32.mrb[0].mxu0
        %1632 = vmatprep.mubr.bf16.mxu0 %v1020
        %1633 = vmatmul.mubr.bf16.gmra.mrb[0].mxu0 %v1019
        %v1634 = vpop.f32.mrb[0].mxu0
        %v1635 = vadd.f32 %v1518, %v1634
        %v1636 = vpop.f32.mrb[0].mxu0
        %v1637 = vpop.f32.mrb[0].mxu0
        %v1638 = vadd.f32 %v1518, %v1637
        %v1639 = vpop.f32.mrb[0].mxu0
        %1640 = vmatprep.mubr.bf16.mxu0 %v1022
        %1641 = vmatmul.mubr.bf16.gmra.mrb[0].mxu0 %v1021
        %v1642 = vpop.f32.mrb[0].mxu0
        %v1643 = vadd.f32 %v1518, %v1642
        %v1644 = vpop.f32.mrb[0].mxu0
        %v1645 = vpop.f32.mrb[0].mxu0
        %v1646 = vadd.f32 %v1518, %v1645
        %v1647 = vpop.f32.mrb[0].mxu0
        %1648 = vmatprep.mubr.bf16.mxu0 %v1024
        %1649 = vmatmul.mubr.bf16.gmra.mrb[0].mxu0 %v1023
        %v1650 = vpop.f32.mrb[0].mxu0
        %v1651 = vadd.f32 %v1518, %v1650
        %v1652 = vpop.f32.mrb[0].mxu0
        %v1653 = vpop.f32.mrb[0].mxu0
        %v1654 = vadd.f32 %v1518, %v1653
        %v1655 = vpop.f32.mrb[0].mxu0
        %1656 = vmatprep.mubr.bf16.mxu0 %v1026
        %1657 = vmatmul.mubr.bf16.gmra.mrb[0].mxu0 %v1025
        %v1658 = vpop.f32.mrb[0].mxu0
        %v1659 = vadd.f32 %v1518, %v1658
        %v1660 = vpop.f32.mrb[0].mxu0
        %v1661 = vpop.f32.mrb[0].mxu0
        %v1662 = vadd.f32 %v1518, %v1661
        %v1663 = vpop.f32.mrb[0].mxu0
        %1664 = vmatprep.mubr.bf16.mxu0 %v1028
        %1665 = vmatmul.mubr.bf16.gmra.mrb[0].mxu0 %v1027
        %v1666 = vpop.f32.mrb[0].mxu0
        %v1667 = vadd.f32 %v1518, %v1666
        %v1668 = vpop.f32.mrb[0].mxu0
        %v1669 = vpop.f32.mrb[0].mxu0
        %v1670 = vadd.f32 %v1518, %v1669
        %v1671 = vpop.f32.mrb[0].mxu0
        %1672 = vmatprep.mubr.bf16.mxu0 %v1030
        %1673 = vmatmul.mubr.bf16.gmra.mrb[0].mxu0 %v1029
        %v1674 = vpop.f32.mrb[0].mxu0
        %v1675 = vadd.f32 %v1518, %v1674
        %v1676 = vpop.f32.mrb[0].mxu0
        %v1677 = vpop.f32.mrb[0].mxu0
        %v1678 = vadd.f32 %v1518, %v1677
        %v1679 = vpop.f32.mrb[0].mxu0
        %1680 = vdwg.mxu0
        %v1681 = vmax.f32 %v1555, 0.0
        %v1682 = vmax.f32 %v1558, 0.0
        %v1683 = vmax.f32 %v1563, 0.0
        %v1684 = vmax.f32 %v1566, 0.0
        %v1685 = vmax.f32 %v1571, 0.0
        %v1686 = vmax.f32 %v1574, 0.0
        %v1687 = vmax.f32 %v1579, 0.0
        %v1688 = vmax.f32 %v1582, 0.0
        %v1689 = vmax.f32 %v1587, 0.0
        %v1690 = vmax.f32 %v1590, 0.0
        %v1691 = vmax.f32 %v1595, 0.0
        %v1692 = vmax.f32 %v1598, 0.0
        %v1693 = vmax.f32 %v1603, 0.0
        %v1694 = vmax.f32 %v1606, 0.0
        %v1695 = vmax.f32 %v1611, 0.0
        %v1696 = vmax.f32 %v1614, 0.0
        %v1697 = vmax.f32 %v1619, 0.0
        %v1698 = vmax.f32 %v1622, 0.0
        %v1699 = vmax.f32 %v1627, 0.0
        %v1700 = vmax.f32 %v1630, 0.0
        %v1701 = vmax.f32 %v1635, 0.0
        %v1702 = vmax.f32 %v1638, 0.0
        %v1703 = vmax.f32 %v1643, 0.0
        %v1704 = vmax.f32 %v1646, 0.0
        %v1705 = vmax.f32 %v1651, 0.0
        %v1706 = vmax.f32 %v1654, 0.0
        %v1707 = vmax.f32 %v1659, 0.0
        %v1708 = vmax.f32 %v1662, 0.0
        %v1709 = vmax.f32 %v1667, 0.0
        %v1710 = vmax.f32 %v1670, 0.0
        %v1711 = vmax.f32 %v1675, 0.0
        %v1712 = vmax.f32 %v1678, 0.0
        %v1713 = vpack.c.bf16 %v1682, %v1681
        %v1714 = vpack.c.bf16 %v1684, %v1683
        %v1715 = vpack.c.bf16 %v1686, %v1685
        %v1716 = vpack.c.bf16 %v1688, %v1687
        %v1717 = vpack.c.bf16 %v1690, %v1689
        %v1718 = vpack.c.bf16 %v1692, %v1691
        %v1719 = vpack.c.bf16 %v1694, %v1693
        %v1720 = vpack.c.bf16 %v1696, %v1695
        %v1721 = vpack.c.bf16 %v1698, %v1697
        %v1722 = vpack.c.bf16 %v1700, %v1699
        %v1723 = vpack.c.bf16 %v1702, %v1701
        %v1724 = vpack.c.bf16 %v1704, %v1703
        %v1725 = vpack.c.bf16 %v1706, %v1705
        %v1726 = vpack.c.bf16 %v1708, %v1707
        %v1727 = vpack.c.bf16 %v1710, %v1709
        %v1728 = vpack.c.bf16 %v1712, %v1711
        %v1729 = vld [vmem:[#allocation10] sm:$0xf]
        %v1730 = vld [vmem:[#allocation10 + $0x4] sm:$0xf]
        %v1731 = vld [vmem:[#allocation10 + $0x8] sm:$0xf]
        %v1732 = vld [vmem:[#allocation10 + $0xc] sm:$0xf]
        %v1733 = vld [vmem:[#allocation10 + $0x10] sm:$0xf]
        %v1734 = vld [vmem:[#allocation10 + $0x14] sm:$0xf]
        %v1735 = vld [vmem:[#allocation10 + $0x18] sm:$0xf]
        %v1736 = vld [vmem:[#allocation10 + $0x1c] sm:$0xf]
        %v1737 = vld [vmem:[#allocation10 + $0x20] sm:$0xf]
        %v1738 = vld [vmem:[#allocation10 + $0x24] sm:$0xf]
        %v1739 = vld [vmem:[#allocation10 + $0x28] sm:$0xf]
        %v1740 = vld [vmem:[#allocation10 + $0x2c] sm:$0xf]
        %v1741 = vld [vmem:[#allocation10 + $0x30] sm:$0xf]
        %v1742 = vld [vmem:[#allocation10 + $0x34] sm:$0xf]
        %v1743 = vld [vmem:[#allocation10 + $0x38] sm:$0xf]
        %v1744 = vld [vmem:[#allocation10 + $0x3c] sm:$0xf]
        %v1761 = vunpack.c.l.b16 %v1729
        %v1762 = vunpack.c.l.b16 %v1730
        %v1763 = vunpack.c.l.b16 %v1731
        %v1764 = vunpack.c.l.b16 %v1732
        %v1765 = vunpack.c.l.b16 %v1733
        %v1766 = vunpack.c.l.b16 %v1734
        %v1767 = vunpack.c.l.b16 %v1735
        %v1768 = vunpack.c.l.b16 %v1736
        %v1769 = vunpack.c.l.b16 %v1737
        %v1770 = vunpack.c.l.b16 %v1738
        %v1771 = vunpack.c.l.b16 %v1739
        %v1772 = vunpack.c.l.b16 %v1740
        %v1773 = vunpack.c.l.b16 %v1741
        %v1774 = vunpack.c.l.b16 %v1742
        %v1775 = vunpack.c.l.b16 %v1743
        %v1776 = vunpack.c.l.b16 %v1744
        %v1777 = vpack.c.b16 %v1762, %v1761
        %v1778 = vpack.c.b16 %v1764, %v1763
        %v1779 = vpack.c.b16 %v1766, %v1765
        %v1780 = vpack.c.b16 %v1768, %v1767
        %v1781 = vpack.c.b16 %v1770, %v1769
        %v1782 = vpack.c.b16 %v1772, %v1771
        %v1783 = vpack.c.b16 %v1774, %v1773
        %v1784 = vpack.c.b16 %v1776, %v1775
        %1793 = vmatprep.subr.bf16.mxu0 0
        %1794 = vmatpush1.bf16.msra.mxu0 %v1777
        %1795 = vmatprep.subr.bf16.mxu0 0
        %1796 = vmatpush1.bf16.msra.mxu0 %v1778
        %1797 = vmatprep.subr.bf16.mxu0 0
        %1798 = vmatpush1.bf16.msra.mxu0 %v1779
        %1799 = vmatprep.subr.bf16.mxu0 0
        %1800 = vmatpush1.bf16.msra.mxu0 %v1780
        %1801 = vmatprep.subr.bf16.mxu0 0
        %1802 = vmatpush1.bf16.msra.mxu0 %v1781
        %1803 = vmatprep.subr.bf16.mxu0 0
        %1804 = vmatpush1.bf16.msra.mxu0 %v1782
        %1805 = vmatprep.subr.bf16.mxu0 0
        %1806 = vmatpush1.bf16.msra.mxu0 %v1783
        %1807 = vmatprep.subr.bf16.mxu0 0
        %1808 = vmatpush1.bf16.msra.mxu0 %v1784
        %1809 = vmatprep.subr.bf16.mxu0 0
        %1810 = vmatpush1.bf16.msra.mxu0 0
        %1811 = vmatprep.subr.bf16.mxu0 0
        %1812 = vmatpush1.bf16.msra.mxu0 0
        %1813 = vmatprep.subr.bf16.mxu0 0
        %1814 = vmatpush1.bf16.msra.mxu0 0
        %1815 = vmatprep.subr.bf16.mxu0 0
        %1816 = vmatpush1.bf16.msra.mxu0 0
        %1817 = vmatprep.subr.bf16.mxu0 0
        %1818 = vmatpush1.bf16.msra.mxu0 0
        %1819 = vmatprep.subr.bf16.mxu0 0
        %1820 = vmatpush1.bf16.msra.mxu0 0
        %1821 = vmatprep.subr.bf16.mxu0 0
        %1822 = vmatpush1.bf16.msra.mxu0 0
        %1823 = vmatprep.subr.bf16.mxu0 0
        %1824 = vmatpush1.bf16.msra.mxu0 0
        %1825 = vmatprep.mubr.bf16.mxu0 0
        %1826 = vmatmul.mubr.bf16.gmra.mrb[0].mxu0 %v1713
        %v1827 = vpop.f32.mrb[0].mxu0
        %v1828 = vadd.f32 0.0, %v1827
        %v1829 = vpop.f32.mrb[0].mxu0
        %v1830 = vpop.f32.mrb[0].mxu0
        %v1831 = vadd.f32 0.0, %v1830
        %v1832 = vpop.f32.mrb[0].mxu0
        %1833 = vmatprep.mubr.bf16.mxu0 0
        %1834 = vmatmul.mubr.bf16.gmra.mrb[0].mxu0 %v1714
        %v1835 = vpop.f32.mrb[0].mxu0
        %v1836 = vadd.f32 0.0, %v1835
        %v1837 = vpop.f32.mrb[0].mxu0
        %v1838 = vpop.f32.mrb[0].mxu0
        %v1839 = vadd.f32 0.0, %v1838
        %v1840 = vpop.f32.mrb[0].mxu0
        %1841 = vmatprep.mubr.bf16.mxu0 0
        %1842 = vmatmul.mubr.bf16.gmra.mrb[0].mxu0 %v1715
        %v1843 = vpop.f32.mrb[0].mxu0
        %v1844 = vadd.f32 0.0, %v1843
        %v1845 = vpop.f32.mrb[0].mxu0
        %v1846 = vpop.f32.mrb[0].mxu0
        %v1847 = vadd.f32 0.0, %v1846
        %v1848 = vpop.f32.mrb[0].mxu0
        %1849 = vmatprep.mubr.bf16.mxu0 0
        %1850 = vmatmul.mubr.bf16.gmra.mrb[0].mxu0 %v1716
        %v1851 = vpop.f32.mrb[0].mxu0
        %v1852 = vadd.f32 0.0, %v1851
        %v1853 = vpop.f32.mrb[0].mxu0
        %v1854 = vpop.f32.mrb[0].mxu0
        %v1855 = vadd.f32 0.0, %v1854
        %v1856 = vpop.f32.mrb[0].mxu0
        %1857 = vmatprep.mubr.bf16.mxu0 0
        %1858 = vmatmul.mubr.bf16.gmra.mrb[0].mxu0 %v1717
        %v1859 = vpop.f32.mrb[0].mxu0
        %v1860 = vadd.f32 0.0, %v1859
        %v1861 = vpop.f32.mrb[0].mxu0
        %v1862 = vpop.f32.mrb[0].mxu0
        %v1863 = vadd.f32 0.0, %v1862
        %v1864 = vpop.f32.mrb[0].mxu0
        %1865 = vmatprep.mubr.bf16.mxu0 0
        %1866 = vmatmul.mubr.bf16.gmra.mrb[0].mxu0 %v1718
        %v1867 = vpop.f32.mrb[0].mxu0
        %v1868 = vadd.f32 0.0, %v1867
        %v1869 = vpop.f32.mrb[0].mxu0
        %v1870 = vpop.f32.mrb[0].mxu0
        %v1871 = vadd.f32 0.0, %v1870
        %v1872 = vpop.f32.mrb[0].mxu0
        %1873 = vmatprep.mubr.bf16.mxu0 0
        %1874 = vmatmul.mubr.bf16.gmra.mrb[0].mxu0 %v1719
        %v1875 = vpop.f32.mrb[0].mxu0
        %v1876 = vadd.f32 0.0, %v1875
        %v1877 = vpop.f32.mrb[0].mxu0
        %v1878 = vpop.f32.mrb[0].mxu0
        %v1879 = vadd.f32 0.0, %v1878
        %v1880 = vpop.f32.mrb[0].mxu0
        %1881 = vmatprep.mubr.bf16.mxu0 0
        %1882 = vmatmul.mubr.bf16.gmra.mrb[0].mxu0 %v1720
        %v1883 = vpop.f32.mrb[0].mxu0
        %v1884 = vadd.f32 0.0, %v1883
        %v1885 = vpop.f32.mrb[0].mxu0
        %v1886 = vpop.f32.mrb[0].mxu0
        %v1887 = vadd.f32 0.0, %v1886
        %v1888 = vpop.f32.mrb[0].mxu0
        %1889 = vmatprep.mubr.bf16.mxu0 0
        %1890 = vmatmul.mubr.bf16.gmra.mrb[0].mxu0 %v1721
        %v1891 = vpop.f32.mrb[0].mxu0
        %v1892 = vadd.f32 0.0, %v1891
        %v1893 = vpop.f32.mrb[0].mxu0
        %v1894 = vpop.f32.mrb[0].mxu0
        %v1895 = vadd.f32 0.0, %v1894
        %v1896 = vpop.f32.mrb[0].mxu0
        %1897 = vmatprep.mubr.bf16.mxu0 0
        %1898 = vmatmul.mubr.bf16.gmra.mrb[0].mxu0 %v1722
        %v1899 = vpop.f32.mrb[0].mxu0
        %v1900 = vadd.f32 0.0, %v1899
        %v1901 = vpop.f32.mrb[0].mxu0
        %v1902 = vpop.f32.mrb[0].mxu0
        %v1903 = vadd.f32 0.0, %v1902
        %v1904 = vpop.f32.mrb[0].mxu0
        %1905 = vmatprep.mubr.bf16.mxu0 0
        %1906 = vmatmul.mubr.bf16.gmra.mrb[0].mxu0 %v1723
        %v1907 = vpop.f32.mrb[0].mxu0
        %v1908 = vadd.f32 0.0, %v1907
        %v1909 = vpop.f32.mrb[0].mxu0
        %v1910 = vpop.f32.mrb[0].mxu0
        %v1911 = vadd.f32 0.0, %v1910
        %v1912 = vpop.f32.mrb[0].mxu0
        %1913 = vmatprep.mubr.bf16.mxu0 0
        %1914 = vmatmul.mubr.bf16.gmra.mrb[0].mxu0 %v1724
        %v1915 = vpop.f32.mrb[0].mxu0
        %v1916 = vadd.f32 0.0, %v1915
        %v1917 = vpop.f32.mrb[0].mxu0
        %v1918 = vpop.f32.mrb[0].mxu0
        %v1919 = vadd.f32 0.0, %v1918
        %v1920 = vpop.f32.mrb[0].mxu0
        %1921 = vmatprep.mubr.bf16.mxu0 0
        %1922 = vmatmul.mubr.bf16.gmra.mrb[0].mxu0 %v1725
        %v1923 = vpop.f32.mrb[0].mxu0
        %v1924 = vadd.f32 0.0, %v1923
        %v1925 = vpop.f32.mrb[0].mxu0
        %v1926 = vpop.f32.mrb[0].mxu0
        %v1927 = vadd.f32 0.0, %v1926
        %v1928 = vpop.f32.mrb[0].mxu0
        %1929 = vmatprep.mubr.bf16.mxu0 0
        %1930 = vmatmul.mubr.bf16.gmra.mrb[0].mxu0 %v1726
        %v1931 = vpop.f32.mrb[0].mxu0
        %v1932 = vadd.f32 0.0, %v1931
        %v1933 = vpop.f32.mrb[0].mxu0
        %v1934 = vpop.f32.mrb[0].mxu0
        %v1935 = vadd.f32 0.0, %v1934
        %v1936 = vpop.f32.mrb[0].mxu0
        %1937 = vmatprep.mubr.bf16.mxu0 0
        %1938 = vmatmul.mubr.bf16.gmra.mrb[0].mxu0 %v1727
        %v1939 = vpop.f32.mrb[0].mxu0
        %v1940 = vadd.f32 0.0, %v1939
        %v1941 = vpop.f32.mrb[0].mxu0
        %v1942 = vpop.f32.mrb[0].mxu0
        %v1943 = vadd.f32 0.0, %v1942
        %v1944 = vpop.f32.mrb[0].mxu0
        %1945 = vmatprep.mubr.bf16.mxu0 0
        %1946 = vmatmul.mubr.bf16.gmra.mrb[0].mxu0 %v1728
        %v1947 = vpop.f32.mrb[0].mxu0
        %v1948 = vadd.f32 0.0, %v1947
        %v1949 = vpop.f32.mrb[0].mxu0
        %v1950 = vpop.f32.mrb[0].mxu0
        %v1951 = vadd.f32 0.0, %v1950
        %v1952 = vpop.f32.mrb[0].mxu0
        %1953 = vdwg.mxu0
        %v1954 = vpack.c.bf16 %v1831, %v1828
        %v1955 = vpack.c.bf16 %v1839, %v1836
        %v1956 = vpack.c.bf16 %v1847, %v1844
        %v1957 = vpack.c.bf16 %v1855, %v1852
        %v1958 = vpack.c.bf16 %v1863, %v1860
        %v1959 = vpack.c.bf16 %v1871, %v1868
        %v1960 = vpack.c.bf16 %v1879, %v1876
        %v1961 = vpack.c.bf16 %v1887, %v1884
        %v1962 = vpack.c.bf16 %v1895, %v1892
        %v1963 = vpack.c.bf16 %v1903, %v1900
        %v1964 = vpack.c.bf16 %v1911, %v1908
        %v1965 = vpack.c.bf16 %v1919, %v1916
        %v1966 = vpack.c.bf16 %v1927, %v1924
        %v1967 = vpack.c.bf16 %v1935, %v1932
        %v1968 = vpack.c.bf16 %v1943, %v1940
        %v1969 = vpack.c.bf16 %v1951, %v1948
        %v1970 = vld [vmem:[%s7] sm:$0x1]
        %v1972 = vlaneseq
        %v1973 = vshrl.u32 %v1972, 7
        %v1974 = vsub.s32 0, %v1973
        %v1975 = vrot.slane %v1970, %v1974
        %1977 = vmatprep.subr.bf16.mxu0 0
        %1978 = vmatpush1.bf16.msra.mxu0 %v1954
        %1979 = vmatprep.subr.bf16.mxu0 0
        %1980 = vmatpush1.bf16.msra.mxu0 %v1955
        %1981 = vmatprep.subr.bf16.mxu0 0
        %1982 = vmatpush1.bf16.msra.mxu0 %v1956
        %1983 = vmatprep.subr.bf16.mxu0 0
        %1984 = vmatpush1.bf16.msra.mxu0 %v1957
        %1985 = vmatprep.subr.bf16.mxu0 0
        %1986 = vmatpush1.bf16.msra.mxu0 %v1958
        %1987 = vmatprep.subr.bf16.mxu0 0
        %1988 = vmatpush1.bf16.msra.mxu0 %v1959
        %1989 = vmatprep.subr.bf16.mxu0 0
        %1990 = vmatpush1.bf16.msra.mxu0 %v1960
        %1991 = vmatprep.subr.bf16.mxu0 0
        %1992 = vmatpush1.bf16.msra.mxu0 %v1961
        %1993 = vmatprep.subr.bf16.mxu0 0
        %1994 = vmatpush1.bf16.msra.mxu0 %v1962
        %1995 = vmatprep.subr.bf16.mxu0 0
        %1996 = vmatpush1.bf16.msra.mxu0 %v1963
        %1997 = vmatprep.subr.bf16.mxu0 0
        %1998 = vmatpush1.bf16.msra.mxu0 %v1964
        %1999 = vmatprep.subr.bf16.mxu0 0
        %2000 = vmatpush1.bf16.msra.mxu0 %v1965
        %2001 = vmatprep.subr.bf16.mxu0 0
        %2002 = vmatpush1.bf16.msra.mxu0 %v1966
        %2003 = vmatprep.subr.bf16.mxu0 0
        %2004 = vmatpush1.bf16.msra.mxu0 %v1967
        %2005 = vmatprep.subr.bf16.mxu0 0
        %2006 = vmatpush1.bf16.msra.mxu0 %v1968
        %2007 = vmatprep.subr.bf16.mxu0 0
        %2008 = vmatpush1.bf16.msra.mxu0 %v1969
        %2009 = vmatprep.mubr.bf16.mxu0 %v1000
        %2010 = vmatmul.mubr.bf16.gmra.mrb[0].mxu0 %v999
        %v2011 = vpop.f32.mrb[0].mxu0
        %v2012 = vadd.f32 %v1975, %v2011
        %v2013 = vpop.f32.mrb[0].mxu0
        %v2014 = vpop.f32.mrb[0].mxu0
        %v2015 = vadd.f32 %v1975, %v2014
        %v2016 = vpop.f32.mrb[0].mxu0
        %2017 = vmatprep.mubr.bf16.mxu0 %v1002
        %2018 = vmatmul.mubr.bf16.gmra.mrb[0].mxu0 %v1001
        %v2019 = vpop.f32.mrb[0].mxu0
        %v2020 = vadd.f32 %v1975, %v2019
        %v2021 = vpop.f32.mrb[0].mxu0
        %v2022 = vpop.f32.mrb[0].mxu0
        %v2023 = vadd.f32 %v1975, %v2022
        %v2024 = vpop.f32.mrb[0].mxu0
        %2025 = vmatprep.mubr.bf16.mxu0 %v1004
        %2026 = vmatmul.mubr.bf16.gmra.mrb[0].mxu0 %v1003
        %v2027 = vpop.f32.mrb[0].mxu0
        %v2028 = vadd.f32 %v1975, %v2027
        %v2029 = vpop.f32.mrb[0].mxu0
        %v2030 = vpop.f32.mrb[0].mxu0
        %v2031 = vadd.f32 %v1975, %v2030
        %v2032 = vpop.f32.mrb[0].mxu0
        %2033 = vmatprep.mubr.bf16.mxu0 %v1006
        %2034 = vmatmul.mubr.bf16.gmra.mrb[0].mxu0 %v1005
        %v2035 = vpop.f32.mrb[0].mxu0
        %v2036 = vadd.f32 %v1975, %v2035
        %v2037 = vpop.f32.mrb[0].mxu0
        %v2038 = vpop.f32.mrb[0].mxu0
        %v2039 = vadd.f32 %v1975, %v2038
        %v2040 = vpop.f32.mrb[0].mxu0
        %2041 = vmatprep.mubr.bf16.mxu0 %v1008
        %2042 = vmatmul.mubr.bf16.gmra.mrb[0].mxu0 %v1007
        %v2043 = vpop.f32.mrb[0].mxu0
        %v2044 = vadd.f32 %v1975, %v2043
        %v2045 = vpop.f32.mrb[0].mxu0
        %v2046 = vpop.f32.mrb[0].mxu0
        %v2047 = vadd.f32 %v1975, %v2046
        %v2048 = vpop.f32.mrb[0].mxu0
        %2049 = vmatprep.mubr.bf16.mxu0 %v1010
        %2050 = vmatmul.mubr.bf16.gmra.mrb[0].mxu0 %v1009
        %v2051 = vpop.f32.mrb[0].mxu0
        %v2052 = vadd.f32 %v1975, %v2051
        %v2053 = vpop.f32.mrb[0].mxu0
        %v2054 = vpop.f32.mrb[0].mxu0
        %v2055 = vadd.f32 %v1975, %v2054
        %v2056 = vpop.f32.mrb[0].mxu0
        %2057 = vmatprep.mubr.bf16.mxu0 %v1012
        %2058 = vmatmul.mubr.bf16.gmra.mrb[0].mxu0 %v1011
        %v2059 = vpop.f32.mrb[0].mxu0
        %v2060 = vadd.f32 %v1975, %v2059
        %v2061 = vpop.f32.mrb[0].mxu0
        %v2062 = vpop.f32.mrb[0].mxu0
        %v2063 = vadd.f32 %v1975, %v2062
        %v2064 = vpop.f32.mrb[0].mxu0
        %2065 = vmatprep.mubr.bf16.mxu0 %v1014
        %2066 = vmatmul.mubr.bf16.gmra.mrb[0].mxu0 %v1013
        %v2067 = vpop.f32.mrb[0].mxu0
        %v2068 = vadd.f32 %v1975, %v2067
        %v2069 = vpop.f32.mrb[0].mxu0
        %v2070 = vpop.f32.mrb[0].mxu0
        %v2071 = vadd.f32 %v1975, %v2070
        %v2072 = vpop.f32.mrb[0].mxu0
        %2073 = vmatprep.mubr.bf16.mxu0 %v1016
        %2074 = vmatmul.mubr.bf16.gmra.mrb[0].mxu0 %v1015
        %v2075 = vpop.f32.mrb[0].mxu0
        %v2076 = vadd.f32 %v1975, %v2075
        %v2077 = vpop.f32.mrb[0].mxu0
        %v2078 = vpop.f32.mrb[0].mxu0
        %v2079 = vadd.f32 %v1975, %v2078
        %v2080 = vpop.f32.mrb[0].mxu0
        %2081 = vmatprep.mubr.bf16.mxu0 %v1018
        %2082 = vmatmul.mubr.bf16.gmra.mrb[0].mxu0 %v1017
        %v2083 = vpop.f32.mrb[0].mxu0
        %v2084 = vadd.f32 %v1975, %v2083
        %v2085 = vpop.f32.mrb[0].mxu0
        %v2086 = vpop.f32.mrb[0].mxu0
        %v2087 = vadd.f32 %v1975, %v2086
        %v2088 = vpop.f32.mrb[0].mxu0
        %2089 = vmatprep.mubr.bf16.mxu0 %v1020
        %2090 = vmatmul.mubr.bf16.gmra.mrb[0].mxu0 %v1019
        %v2091 = vpop.f32.mrb[0].mxu0
        %v2092 = vadd.f32 %v1975, %v2091
        %v2093 = vpop.f32.mrb[0].mxu0
        %v2094 = vpop.f32.mrb[0].mxu0
        %v2095 = vadd.f32 %v1975, %v2094
        %v2096 = vpop.f32.mrb[0].mxu0
        %2097 = vmatprep.mubr.bf16.mxu0 %v1022
        %2098 = vmatmul.mubr.bf16.gmra.mrb[0].mxu0 %v1021
        %v2099 = vpop.f32.mrb[0].mxu0
        %v2100 = vadd.f32 %v1975, %v2099
        %v2101 = vpop.f32.mrb[0].mxu0
        %v2102 = vpop.f32.mrb[0].mxu0
        %v2103 = vadd.f32 %v1975, %v2102
        %v2104 = vpop.f32.mrb[0].mxu0
        %2105 = vmatprep.mubr.bf16.mxu0 %v1024
        %2106 = vmatmul.mubr.bf16.gmra.mrb[0].mxu0 %v1023
        %v2107 = vpop.f32.mrb[0].mxu0
        %v2108 = vadd.f32 %v1975, %v2107
        %v2109 = vpop.f32.mrb[0].mxu0
        %v2110 = vpop.f32.mrb[0].mxu0
        %v2111 = vadd.f32 %v1975, %v2110
        %v2112 = vpop.f32.mrb[0].mxu0
        %2113 = vmatprep.mubr.bf16.mxu0 %v1026
        %2114 = vmatmul.mubr.bf16.gmra.mrb[0].mxu0 %v1025
        %v2115 = vpop.f32.mrb[0].mxu0
        %v2116 = vadd.f32 %v1975, %v2115
        %v2117 = vpop.f32.mrb[0].mxu0
        %v2118 = vpop.f32.mrb[0].mxu0
        %v2119 = vadd.f32 %v1975, %v2118
        %v2120 = vpop.f32.mrb[0].mxu0
        %2121 = vmatprep.mubr.bf16.mxu0 %v1028
        %2122 = vmatmul.mubr.bf16.gmra.mrb[0].mxu0 %v1027
        %v2123 = vpop.f32.mrb[0].mxu0
        %v2124 = vadd.f32 %v1975, %v2123
        %v2125 = vpop.f32.mrb[0].mxu0
        %v2126 = vpop.f32.mrb[0].mxu0
        %v2127 = vadd.f32 %v1975, %v2126
        %v2128 = vpop.f32.mrb[0].mxu0
        %2129 = vmatprep.mubr.bf16.mxu0 %v1030
        %2130 = vmatmul.mubr.bf16.gmra.mrb[0].mxu0 %v1029
        %v2131 = vpop.f32.mrb[0].mxu0
        %v2132 = vadd.f32 %v1975, %v2131
        %v2133 = vpop.f32.mrb[0].mxu0
        %v2134 = vpop.f32.mrb[0].mxu0
        %v2135 = vadd.f32 %v1975, %v2134
        %v2136 = vpop.f32.mrb[0].mxu0
        %2137 = vdwg.mxu0
        %v2138 = vmax.f32 %v2012, 0.0
        %v2139 = vmax.f32 %v2015, 0.0
        %v2140 = vmax.f32 %v2020, 0.0
        %v2141 = vmax.f32 %v2023, 0.0
        %v2142 = vmax.f32 %v2028, 0.0
        %v2143 = vmax.f32 %v2031, 0.0
        %v2144 = vmax.f32 %v2036, 0.0
        %v2145 = vmax.f32 %v2039, 0.0
        %v2146 = vmax.f32 %v2044, 0.0
        %v2147 = vmax.f32 %v2047, 0.0
        %v2148 = vmax.f32 %v2052, 0.0
        %v2149 = vmax.f32 %v2055, 0.0
        %v2150 = vmax.f32 %v2060, 0.0
        %v2151 = vmax.f32 %v2063, 0.0
        %v2152 = vmax.f32 %v2068, 0.0
        %v2153 = vmax.f32 %v2071, 0.0
        %v2154 = vmax.f32 %v2076, 0.0
        %v2155 = vmax.f32 %v2079, 0.0
        %v2156 = vmax.f32 %v2084, 0.0
        %v2157 = vmax.f32 %v2087, 0.0
        %v2158 = vmax.f32 %v2092, 0.0
        %v2159 = vmax.f32 %v2095, 0.0
        %v2160 = vmax.f32 %v2100, 0.0
        %v2161 = vmax.f32 %v2103, 0.0
        %v2162 = vmax.f32 %v2108, 0.0
        %v2163 = vmax.f32 %v2111, 0.0
        %v2164 = vmax.f32 %v2116, 0.0
        %v2165 = vmax.f32 %v2119, 0.0
        %v2166 = vmax.f32 %v2124, 0.0
        %v2167 = vmax.f32 %v2127, 0.0
        %v2168 = vmax.f32 %v2132, 0.0
        %v2169 = vmax.f32 %v2135, 0.0
        %v2170 = vld [vmem:[#allocation11] sm:$0xff]
        %v2171 = vld [vmem:[#allocation11 + $0x8] sm:$0xff]
        %v2172 = vld [vmem:[#allocation11 + $0x10] sm:$0xff]
        %v2173 = vld [vmem:[#allocation11 + $0x18] sm:$0xff]
        %v2174 = vpack.c.bf16 %v2139, %v2138
        %v2175 = vpack.c.bf16 %v2141, %v2140
        %v2176 = vpack.c.bf16 %v2143, %v2142
        %v2177 = vpack.c.bf16 %v2145, %v2144
        %v2178 = vpack.c.bf16 %v2147, %v2146
        %v2179 = vpack.c.bf16 %v2149, %v2148
        %v2180 = vpack.c.bf16 %v2151, %v2150
        %v2181 = vpack.c.bf16 %v2153, %v2152
        %v2182 = vpack.c.bf16 %v2155, %v2154
        %v2183 = vpack.c.bf16 %v2157, %v2156
        %v2184 = vpack.c.bf16 %v2159, %v2158
        %v2185 = vpack.c.bf16 %v2161, %v2160
        %v2186 = vpack.c.bf16 %v2163, %v2162
        %v2187 = vpack.c.bf16 %v2165, %v2164
        %v2188 = vpack.c.bf16 %v2167, %v2166
        %v2189 = vpack.c.bf16 %v2169, %v2168
        %v2194 = vunpack.c.l.b16 %v2170
        %v2195 = vunpack.c.h.b16 %v2170
        %v2196 = vunpack.c.l.b16 %v2171
        %v2197 = vunpack.c.h.b16 %v2171
        %v2198 = vunpack.c.l.b16 %v2172
        %v2199 = vunpack.c.h.b16 %v2172
        %v2200 = vunpack.c.l.b16 %v2173
        %v2201 = vunpack.c.h.b16 %v2173
        %v2202 = vpack.c.b16 %v2196, %v2194
        %v2203 = vpack.c.b16 %v2197, %v2195
        %v2204 = vpack.c.b16 %v2200, %v2198
        %v2205 = vpack.c.b16 %v2201, %v2199
        %2210 = vmatprep.subr.bf16.mxu0 0
        %2211 = vmatpush1.bf16.msra.mxu0 %v2174
        %2212 = vmatprep.subr.bf16.mxu0 0
        %2213 = vmatpush1.bf16.msra.mxu0 %v2175
        %2214 = vmatprep.subr.bf16.mxu0 0
        %2215 = vmatpush1.bf16.msra.mxu0 %v2176
        %2216 = vmatprep.subr.bf16.mxu0 0
        %2217 = vmatpush1.bf16.msra.mxu0 %v2177
        %2218 = vmatprep.subr.bf16.mxu0 0
        %2219 = vmatpush1.bf16.msra.mxu0 %v2178
        %2220 = vmatprep.subr.bf16.mxu0 0
        %2221 = vmatpush1.bf16.msra.mxu0 %v2179
        %2222 = vmatprep.subr.bf16.mxu0 0
        %2223 = vmatpush1.bf16.msra.mxu0 %v2180
        %2224 = vmatprep.subr.bf16.mxu0 0
        %2225 = vmatpush1.bf16.msra.mxu0 %v2181
        %2226 = vmatprep.subr.bf16.mxu0 0
        %2227 = vmatpush1.bf16.msra.mxu0 %v2182
        %2228 = vmatprep.subr.bf16.mxu0 0
        %2229 = vmatpush1.bf16.msra.mxu0 %v2183
        %2230 = vmatprep.subr.bf16.mxu0 0
        %2231 = vmatpush1.bf16.msra.mxu0 %v2184
        %2232 = vmatprep.subr.bf16.mxu0 0
        %2233 = vmatpush1.bf16.msra.mxu0 %v2185
        %2234 = vmatprep.subr.bf16.mxu0 0
        %2235 = vmatpush1.bf16.msra.mxu0 %v2186
        %2236 = vmatprep.subr.bf16.mxu0 0
        %2237 = vmatpush1.bf16.msra.mxu0 %v2187
        %2238 = vmatprep.subr.bf16.mxu0 0
        %2239 = vmatpush1.bf16.msra.mxu0 %v2188
        %2240 = vmatprep.subr.bf16.mxu0 0
        %2241 = vmatpush1.bf16.msra.mxu0 %v2189
        %2242 = vmatprep.mubr.bf16.mxu0 %v2203
        %2243 = vmatmul.mubr.bf16.gmra.mrb[0].mxu0 %v2202
        %v2244 = vpop.f32.mrb[0].mxu0
        %v2245 = vadd.f32 0.0, %v2244
        %v2246 = vpop.f32.mrb[0].mxu0
        %v2247 = vpop.f32.mrb[0].mxu0
        %v2248 = vadd.f32 0.0, %v2247
        %v2249 = vpop.f32.mrb[0].mxu0
        %2250 = vmatprep.mubr.bf16.mxu0 %v2205
        %2251 = vmatmul.mubr.bf16.gmra.mrb[0].mxu0 %v2204
        %v2252 = vpop.f32.mrb[0].mxu0
        %v2253 = vadd.f32 0.0, %v2252
        %v2254 = vpop.f32.mrb[0].mxu0
        %v2255 = vpop.f32.mrb[0].mxu0
        %v2256 = vadd.f32 0.0, %v2255
        %v2257 = vpop.f32.mrb[0].mxu0
        %2258 = vdwg.mxu0
        %v2259 = vpack.c.bf16 %v2248, %v2245
        %v2260 = vpack.c.bf16 %v2256, %v2253
        %v2261 = vld [vmem:[#allocation13] sm:$0xf]
        %v2262 = vld [vmem:[#allocation13 + $0x4] sm:$0xf]
        %v2263 = vld [vmem:[#allocation13 + $0x8] sm:$0xf]
        %v2264 = vld [vmem:[#allocation13 + $0xc] sm:$0xf]
        %v2265 = vld [vmem:[#allocation13 + $0x10] sm:$0xf]
        %v2266 = vld [vmem:[#allocation13 + $0x14] sm:$0xf]
        %v2267 = vld [vmem:[#allocation13 + $0x18] sm:$0xf]
        %v2268 = vld [vmem:[#allocation13 + $0x1c] sm:$0xf]
        %v2269 = vld [vmem:[#allocation13 + $0x20] sm:$0xf]
        %v2270 = vld [vmem:[#allocation13 + $0x24] sm:$0xf]
        %v2271 = vld [vmem:[#allocation13 + $0x28] sm:$0xf]
        %v2272 = vld [vmem:[#allocation13 + $0x2c] sm:$0xf]
        %v2273 = vld [vmem:[#allocation13 + $0x30] sm:$0xf]
        %v2274 = vld [vmem:[#allocation13 + $0x34] sm:$0xf]
        %v2275 = vld [vmem:[#allocation13 + $0x38] sm:$0xf]
        %v2276 = vld [vmem:[#allocation13 + $0x3c] sm:$0xf]
        %v2277 = vld [vmem:[%s10] sm:$0x1]
        %v2279 = vlaneseq
        %v2280 = vshrl.u32 %v2279, 7
        %v2281 = vsub.s32 0, %v2280
        %v2282 = vrot.slane %v2277, %v2281
        %v2300 = vunpack.c.l.b16 %v2261
        %v2301 = vunpack.c.l.b16 %v2262
        %v2302 = vunpack.c.l.b16 %v2263
        %v2303 = vunpack.c.l.b16 %v2264
        %v2304 = vunpack.c.l.b16 %v2265
        %v2305 = vunpack.c.l.b16 %v2266
        %v2306 = vunpack.c.l.b16 %v2267
        %v2307 = vunpack.c.l.b16 %v2268
        %v2308 = vunpack.c.l.b16 %v2269
        %v2309 = vunpack.c.l.b16 %v2270
        %v2310 = vunpack.c.l.b16 %v2271
        %v2311 = vunpack.c.l.b16 %v2272
        %v2312 = vunpack.c.l.b16 %v2273
        %v2313 = vunpack.c.l.b16 %v2274
        %v2314 = vunpack.c.l.b16 %v2275
        %v2315 = vunpack.c.l.b16 %v2276
        %v2316 = vpack.c.b16 %v2301, %v2300
        %v2317 = vpack.c.b16 %v2303, %v2302
        %v2318 = vpack.c.b16 %v2305, %v2304
        %v2319 = vpack.c.b16 %v2307, %v2306
        %v2320 = vpack.c.b16 %v2309, %v2308
        %v2321 = vpack.c.b16 %v2311, %v2310
        %v2322 = vpack.c.b16 %v2313, %v2312
        %v2323 = vpack.c.b16 %v2315, %v2314
        %2332 = vmatprep.subr.bf16.mxu0 0
        %2333 = vmatpush1.bf16.msra.mxu0 %v2316
        %2334 = vmatprep.subr.bf16.mxu0 0
        %2335 = vmatpush1.bf16.msra.mxu0 %v2317
        %2336 = vmatprep.subr.bf16.mxu0 0
        %2337 = vmatpush1.bf16.msra.mxu0 %v2318
        %2338 = vmatprep.subr.bf16.mxu0 0
        %2339 = vmatpush1.bf16.msra.mxu0 %v2319
        %2340 = vmatprep.subr.bf16.mxu0 0
        %2341 = vmatpush1.bf16.msra.mxu0 %v2320
        %2342 = vmatprep.subr.bf16.mxu0 0
        %2343 = vmatpush1.bf16.msra.mxu0 %v2321
        %2344 = vmatprep.subr.bf16.mxu0 0
        %2345 = vmatpush1.bf16.msra.mxu0 %v2322
        %2346 = vmatprep.subr.bf16.mxu0 0
        %2347 = vmatpush1.bf16.msra.mxu0 %v2323
        %2348 = vmatprep.subr.bf16.mxu0 0
        %2349 = vmatpush1.bf16.msra.mxu0 0
        %2350 = vmatprep.subr.bf16.mxu0 0
        %2351 = vmatpush1.bf16.msra.mxu0 0
        %2352 = vmatprep.subr.bf16.mxu0 0
        %2353 = vmatpush1.bf16.msra.mxu0 0
        %2354 = vmatprep.subr.bf16.mxu0 0
        %2355 = vmatpush1.bf16.msra.mxu0 0
        %2356 = vmatprep.subr.bf16.mxu0 0
        %2357 = vmatpush1.bf16.msra.mxu0 0
        %2358 = vmatprep.subr.bf16.mxu0 0
        %2359 = vmatpush1.bf16.msra.mxu0 0
        %2360 = vmatprep.subr.bf16.mxu0 0
        %2361 = vmatpush1.bf16.msra.mxu0 0
        %2362 = vmatprep.subr.bf16.mxu0 0
        %2363 = vmatpush1.bf16.msra.mxu0 0
        %2364 = vmatprep.mubr.bf16.mxu0 0
        %2365 = vmatmul.mubr.bf16.gmra.mrb[0].mxu0 %v2259
        %v2366 = vpop.f32.mrb[0].mxu0
        %v2367 = vadd.f32 %v2282, %v2366
        %v2368 = vpop.f32.mrb[0].mxu0
        %v2369 = vpop.f32.mrb[0].mxu0
        %v2370 = vadd.f32 %v2282, %v2369
        %v2371 = vpop.f32.mrb[0].mxu0
        %2372 = vmatprep.mubr.bf16.mxu0 0
        %2373 = vmatmul.mubr.bf16.gmra.mrb[0].mxu0 %v2260
        %v2374 = vpop.f32.mrb[0].mxu0
        %v2375 = vadd.f32 %v2282, %v2374
        %v2376 = vpop.f32.mrb[0].mxu0
        %v2377 = vpop.f32.mrb[0].mxu0
        %v2378 = vadd.f32 %v2282, %v2377
        %v2379 = vpop.f32.mrb[0].mxu0
        %2380 = vdwg.mxu0
        %2381 = vst [vmem:[%s491] sm:$0xff] %v2367
        %2382 = vst [vmem:[%s491 + $0x8] sm:$0xff] %v2370
        %2383 = vst [vmem:[%s491 + $0x10] sm:$0xff] %v2375
        %2384 = vst [vmem:[%s491 + $0x18] sm:$0xff] %v2378
        %s2385 = sand.u32 %s275, 1
        %s2386 = scalar_lea.sflag [#allocation4], %s2385
        %s2387 = sand.u32 %s275, 1
        %s2388 = smul.addr %s2387, 32
        %s2389 = scalar_lea.vmem [#allocation14], %s2388
        // Predicated region
        $region93: #{tpu_custom_call.1} parent=63 // pred_check
          %p2390 = pneg %p285
        $region94: #{tpu_custom_call.1} parent=63 // pred_check_branch
          %2392 = sbr.rel (%p2390) target = $region96
        $region95: #{tpu_custom_call.1} parent=63 // pred_region
          %s2393 = smul.u32 4, %s31
          %s2395 = ssub.s32 512, 512
          %2396 = vsyncadd %s2386, %s2395
          %s2397 = smul.addr %s2393, 128
          %s2398 = scalar_lea.hbm %s11, %s2397
          %s2399 = sshll.u32 %s2389, 4
          %s2400 = int_to_ptr.vmem [resolvable:$true] %s2399
          %2405 = dma.vmem_to_hbm [thread:$0]  %s2400, 512, %s2398, %s2386, 128, 128, 8
        $region96: #{tpu_custom_call.1} parent=63 // pred_fallthru
          _
      $region64: #{tpu_custom_call.1} parent=5 // pred_fallthru
        _
      %p2406 = scmp.le.s32.totalorder 2, %s26
      // Predicated region
      $region97: #{tpu_custom_call.1} parent=5 // pred_check
        %p2407 = pneg %p2406
      $region98: #{tpu_custom_call.1} parent=5 // pred_check_branch
        %2409 = sbr.rel (%p2407) target = $region100
      $region99: #{tpu_custom_call.1} parent=5 // pred_region
        %s2410 = ssub.s32 %s26, 2
        // Predicated region
        $region101: #{tpu_custom_call.1} parent=99 // pred_check
          %p2411 = pneg %p291
        $region102: #{tpu_custom_call.1} parent=99 // pred_check_branch
          %2413 = sbr.rel (%p2411) target = $region104
        $region103: #{tpu_custom_call.1} parent=99 // pred_region
          %s2414 = sand.u32 %s276, 1
          %s2415 = scalar_lea.sflag [#allocation4], %s2414
          %s2416 = sand.u32 %s276, 1
          %s2417 = smul.addr %s2416, 32
          %s2418 = scalar_lea.vmem [#allocation14], %s2417
          %2419 = dma.done %s2415, 512
        $region104: #{tpu_custom_call.1} parent=99 // pred_fallthru
          _
      $region100: #{tpu_custom_call.1} parent=5 // pred_fallthru
        _
    $region6: #{tpu_custom_call.1} parent=1 // loop_footer
      %s30 = sadd.s32 1, %s26
    $region7: #{tpu_custom_call.1} parent=1 // loop_footer_branch
      %25 = sbr.rel target = $region3
    $region8: #{tpu_custom_call.1} parent=1 // loop_exit
      _
    %2420 = vsyncpa [#allocation3], 1
    %s2421 = scalar_lea.sflag [#allocation3], 1
    %2422 = vsyncpa %s2421, 1
    %2423 = vsyncpa [#allocation6], 1
    %s2424 = scalar_lea.sflag [#allocation6], 1
    %2425 = vsyncpa %s2424, 1
    %2426 = vsyncpa [#allocation9], 1
    %2427 = vsyncpa [#allocation12], 1
    %2428 = vsyncpa [#allocation4], 1
    %s2429 = scalar_lea.sflag [#allocation4], 1
    %2430 = vsyncpa %s2429, 1

</llo_original>
